<compile_context>
chip_gen: v7x
topology: tpu7x:2x2x1
jax: 0.10.0
libtpu: 0.0.40
codegen_flags: <defaults>
</compile_context>

<pallas_src>
import functools

import jax
import jax.numpy as jnp
from jax import lax
from jax.experimental import pallas as pl
from jax.experimental.pallas import tpu as pltpu


# ----------------------------- hardware budget --------------------------------

def _default_vmem_limit():
    """Generation-aware scoped-VMEM budget (v5e/v6e: 128 MiB, v7x: 64 MiB)."""
    try:
        info = pltpu.get_tpu_info()
        cap = int(getattr(info, "vmem_capacity_bytes", 0) or 0)
    except Exception:
        cap = 0
    if cap <= 0:
        return 64 * 1024 * 1024          # safe fallback if the query fails
    return int(min(cap * 3 // 4, 96 * 1024 * 1024))


VMEM_LIMIT = _default_vmem_limit()


# ------------------------------ small helpers --------------------------------

def _round_up(x, m):
    return ((x + m - 1) // m) * m


def _largest_divisor_tile(m, cap=512):
    """Largest multiple-of-8 divisor of m that is <= cap, else the full dim."""
    for c in range(min(m, cap) // 8 * 8, 0, -8):
        if m % c == 0:
            return c
    return m


def _pad2(a, rows, cols):
    r, c = a.shape
    if r == rows and c == cols:
        return a
    return jnp.pad(a, ((0, rows - r), (0, cols - c)))


# --------------------------- fused matmul kernel ------------------------------

def _make_mm_kernel(pre_act, post_act, add_res):
    def kernel(*refs):
        x_ref, w_ref = refs[0], refs[1]
        idx = 2
        if pre_act:
            isc_ref, ibi_ref = refs[idx], refs[idx + 1]
            idx += 2
        osc_ref, obi_ref = refs[idx], refs[idx + 1]
        idx += 2
        if add_res:
            res_ref = refs[idx]
            idx += 1
        o_ref, acc_ref = refs[idx], refs[idx + 1]

        k = pl.program_id(2)

        @pl.when(k == 0)
        def _():
            acc_ref[...] = jnp.zeros_like(acc_ref)

        x = x_ref[...]
        if pre_act:              # folded BN + ReLU on inputs (f32 math on VPU)
            x = jnp.maximum(x.astype(jnp.float32) * isc_ref[...] + ibi_ref[...], 0.0)
        # bf16 operands into the MXU, f32 accumulation.
        # TODO(synk): on v7x verify this lowers to MRB in-place accumulation
        # (vmatres accumulate) rather than pop + vadd + vst.
        acc_ref[...] += jnp.dot(x.astype(jnp.bfloat16), w_ref[...],
                                preferred_element_type=jnp.float32)

        @pl.when(k == pl.num_programs(2) - 1)
        def _():
            acc = acc_ref[...] * osc_ref[...] + obi_ref[...]   # folded BN / bias
            if add_res:
                acc = acc + res_ref[...].astype(jnp.float32)
            if post_act:
                acc = jnp.maximum(acc, 0.0)
            o_ref[...] = acc.astype(o_ref.dtype)

    return kernel


@functools.lru_cache(maxsize=None)
def _get_mm_call(Mp, Kp, Np, tm, tn, tk, pre_act, post_act, add_res, out_dtype):
    out_dt = jnp.dtype(out_dtype)
    kernel = _make_mm_kernel(pre_act, post_act, add_res)

    in_specs = [
        pl.BlockSpec((tm, tk), lambda i, j, k: (i, k)),     # patches / acts
        pl.BlockSpec((tk, tn), lambda i, j, k: (k, j)),     # weights
    ]
    if pre_act:
        in_specs += [pl.BlockSpec((1, tk), lambda i, j, k: (0, k))] * 2
    in_specs += [pl.BlockSpec((1, tn), lambda i, j, k: (0, j))] * 2
    if add_res:
        in_specs += [pl.BlockSpec((tm, tn), lambda i, j, k: (i, j))]

    # Post-tiling traffic: x is re-read once per N block, w once per M block.
    flops = 2 * Mp * Kp * Np
    bytes_accessed = (Mp * Kp * 2 * (Np // tn) + Kp * Np * 2 * (Mp // tm)
                      + Mp * Np * out_dt.itemsize)
    if add_res:
        bytes_accessed += Mp * Np * 2

    # TODO(synk): on v7x, split K over a leading size-2 "parallel" axis with
    # partial-sum outputs so both TensorCores get work when M/N fit one block.
    fn = pl.pallas_call(
        kernel,
        out_shape=jax.ShapeDtypeStruct((Mp, Np), out_dt),
        grid_spec=pltpu.PrefetchScalarGridSpec(
            num_scalar_prefetch=0,
            grid=(Mp // tm, Np // tn, Kp // tk),
            in_specs=in_specs,
            out_specs=pl.BlockSpec((tm, tn), lambda i, j, k: (i, j)),
            scratch_shapes=[pltpu.VMEM((tm, tn), jnp.float32)]),
        compiler_params=pltpu.CompilerParams(
            dimension_semantics=("parallel", "parallel", "arbitrary"),
            vmem_limit_bytes=VMEM_LIMIT),
        cost_estimate=pl.CostEstimate(flops=int(flops), transcendentals=0,
                                      bytes_accessed=int(bytes_accessed)),
    )
    return jax.jit(fn)


def fused_matmul(x, w, in_scale=None, in_bias=None, out_scale=None,
                 out_bias=None, residual=None, post_act=False,
                 out_dtype=jnp.bfloat16):
    """act?((act?(x*s_in+b_in)) @ w * s_out + b_out (+res)).

    Returns (M, Np): the lane/tile padded output columns are exactly zero, so
    callers may keep them (padded-channel convention) or slice them off.
    """
    M, Kx = x.shape
    Kw, N = w.shape
    assert Kw == Kx
    pre_act = in_scale is not None
    add_res = residual is not None

    # Pick tiles first, then pad every dim up to its tile (perf review: avoid
    # the tm=8 / tk=128 divisor fallbacks on M=392 / K=2112 style layers).
    tm = 256 if M >= 256 else max(8, _round_up(M, 8))
    tn = 256 if N > 128 else 128
    tk = 512 if Kx >= 1536 else (256 if Kx > 128 else 128)
    Mp, Kp, Np = _round_up(M, tm), _round_up(Kx, tk), _round_up(N, tn)

    args = [_pad2(x.astype(jnp.bfloat16), Mp, Kp),
            _pad2(w.astype(jnp.bfloat16), Kp, Np)]
    if pre_act:
        # zero-padded K tail: relu(0*0+0)=0 against zero weight rows -> exact.
        args += [_pad2(in_scale.reshape(1, -1).astype(jnp.float32), 1, Kp),
                 _pad2(in_bias.reshape(1, -1).astype(jnp.float32), 1, Kp)]
    osc = (out_scale.reshape(1, N).astype(jnp.float32) if out_scale is not None
           else jnp.ones((1, N), jnp.float32))
    obi = (out_bias.reshape(1, N).astype(jnp.float32) if out_bias is not None
           else jnp.zeros((1, N), jnp.float32))
    args += [_pad2(osc, 1, Np), _pad2(obi, 1, Np)]
    if add_res:
        args += [_pad2(residual.astype(jnp.bfloat16), Mp, Np)]

    call = _get_mm_call(Mp, Kp, Np, tm, tn, tk, pre_act, post_act, add_res,
                        jnp.dtype(out_dtype).name)
    out = call(*args)
    return out[:M] if Mp != M else out


# ------------------------------ pooling kernels --------------------------------

def _max3x3_kernel(p00_ref, p01_ref, p10_ref, p11_ref, o_ref):
    oh, ow = o_ref.shape[1], o_ref.shape[2]
    # Cast to f32 in VMEM so the (possibly unaligned) window slices stay on the
    # best-supported relayout path; HBM traffic remains bf16.
    ph = (p00_ref[...].astype(jnp.float32), p01_ref[...].astype(jnp.float32),
          p10_ref[...].astype(jnp.float32), p11_ref[...].astype(jnp.float32))
    r = None
    for di in range(3):
        for dj in range(3):
            src = ph[(di % 2) * 2 + (dj % 2)]
            win = src[:, di // 2:di // 2 + oh, dj // 2:dj // 2 + ow, :]
            r = win if r is None else jnp.maximum(r, win)
    o_ref[...] = r.astype(o_ref.dtype)


@functools.lru_cache(maxsize=None)
def _get_max3x3_call(n, ph, pw, oh, ow, c, dtype):
    dt = jnp.dtype(dtype)
    in_spec = pl.BlockSpec((1, ph, pw, c), lambda b: (b, 0, 0, 0))
    fn = pl.pallas_call(
        _max3x3_kernel,
        out_shape=jax.ShapeDtypeStruct((n, oh, ow, c), dt),
        grid_spec=pltpu.PrefetchScalarGridSpec(
            num_scalar_prefetch=0, grid=(n,),
            in_specs=[in_spec] * 4,
            out_specs=pl.BlockSpec((1, oh, ow, c), lambda b: (b, 0, 0, 0))),
        compiler_params=pltpu.CompilerParams(
            dimension_semantics=("parallel",), vmem_limit_bytes=VMEM_LIMIT),
    )
    return jax.jit(fn)


def _maxpool_3x3_s2_pallas(x):
    n, h, w, c = x.shape
    oh, ow = h // 2, w // 2
    # Inputs are post-ReLU (>= 0): zero spatial padding == -inf padding for max
    # and keeps any zero-padded channels exactly zero through the pool.
    xp = jnp.pad(x, ((0, 0), (1, 1), (1, 1), (0, 0)))
    # Stride-2 phase decomposition -> every in-kernel window slice is
    # contiguous; no (M, k*k, C) patch tensor is ever materialized in HBM.
    phases = [xp[:, p::2, q::2, :] for p in range(2) for q in range(2)]
    ph, pw = phases[0].shape[1], phases[0].shape[2]
    return _get_max3x3_call(n, ph, pw, oh, ow, c, x.dtype.name)(*phases)


def _maxpool_3x3_s2_xla(x):
    # Fallback only (init 0 is exact for post-ReLU inputs and keeps padded
    # channels finite/zero).
    return lax.reduce_window(x, jnp.array(0, x.dtype), lax.max,
                             (1, 3, 3, 1), (1, 2, 2, 1),
                             ((0, 0), (1, 1), (1, 1), (0, 0)))


@functools.lru_cache(maxsize=None)
def _pallas_maxpool_available():
    try:
        z = jnp.zeros((2, 8, 8, 128), jnp.bfloat16)
        jax.block_until_ready(_maxpool_3x3_s2_pallas(z))
        return True
    except Exception:
        return False


def maxpool_3x3_s2(x):
    if _pallas_maxpool_available():
        return _maxpool_3x3_s2_pallas(x)
    return _maxpool_3x3_s2_xla(x)


def _avg4_kernel(a_ref, b_ref, c_ref, d_ref, o_ref):
    s = (a_ref[...].astype(jnp.float32) + b_ref[...].astype(jnp.float32)
         + c_ref[...].astype(jnp.float32) + d_ref[...].astype(jnp.float32))
    o_ref[...] = (s * 0.25).astype(o_ref.dtype)


@functools.lru_cache(maxsize=None)
def _get_avg4_call(m, c, tm, dtype):
    dt = jnp.dtype(dtype)
    spec = pl.BlockSpec((tm, c), lambda i: (i, 0))
    fn = pl.pallas_call(
        _avg4_kernel,
        out_shape=jax.ShapeDtypeStruct((m, c), dt),
        grid_spec=pltpu.PrefetchScalarGridSpec(
            num_scalar_prefetch=0, grid=(m // tm,),
            in_specs=[spec] * 4, out_specs=spec),
        compiler_params=pltpu.CompilerParams(
            dimension_semantics=("parallel",), vmem_limit_bytes=VMEM_LIMIT),
    )
    return jax.jit(fn)


def avgpool_2x2_s2(x):
    # kernel == stride: the 2x2/s2 average pool is the mean of the 4 phases.
    n, h, w, c = x.shape
    oh, ow = h // 2, w // 2
    m = n * oh * ow
    phases = [x[:, p::2, q::2, :].reshape(m, c) for p in range(2) for q in range(2)]
    tm = _largest_divisor_tile(m, 512)
    out = _get_avg4_call(m, c, tm, x.dtype.name)(*phases)
    return out.reshape(n, oh, ow, c)


def _make_gap_kernel(pre_act):
    def kernel(*refs):
        x_ref = refs[0]
        idx = 1
        if pre_act:
            sc_ref, bi_ref = refs[1], refs[2]
            idx = 3
        o_ref = refs[idx]
        x = x_ref[...].astype(jnp.float32)                  # (tm, P, C)
        if pre_act:                                         # folded BN + ReLU
            x = jnp.maximum(x * sc_ref[...] + bi_ref[...], 0.0)
        o_ref[...] = (jnp.sum(x, axis=1) * (1.0 / x.shape[1])).astype(o_ref.dtype)
    return kernel


@functools.lru_cache(maxsize=None)
def _get_gap_call(m, p, c, tm, pre_act):
    kernel = _make_gap_kernel(pre_act)
    in_specs = [pl.BlockSpec((tm, p, c), lambda i: (i, 0, 0))]
    if pre_act:
        in_specs += [pl.BlockSpec((1, 1, c), lambda i: (0, 0, 0))] * 2
    fn = pl.pallas_call(
        kernel,
        out_shape=jax.ShapeDtypeStruct((m, c), jnp.float32),
        grid_spec=pltpu.PrefetchScalarGridSpec(
            num_scalar_prefetch=0, grid=(m // tm,),
            in_specs=in_specs,
            out_specs=pl.BlockSpec((tm, c), lambda i: (i, 0))),
        compiler_params=pltpu.CompilerParams(
            dimension_semantics=("parallel",), vmem_limit_bytes=VMEM_LIMIT),
    )
    return jax.jit(fn)


def global_avgpool(x, pre_bn=None):
    n, h, w, c = x.shape
    pre_act = pre_bn is not None
    args = [x.reshape(n, h * w, c)]
    if pre_act:
        s, b = pre_bn
        args += [s.reshape(1, 1, c).astype(jnp.float32),
                 b.reshape(1, 1, c).astype(jnp.float32)]
    tm = _largest_divisor_tile(n, 256)
    return _get_gap_call(n, h * w, c, tm, pre_act)(*args)


# ------------------------------- conv glue -------------------------------------

def im2col(x, kh, kw, stride, pad):
    N, H, W, C = x.shape
    if kh == 1 and kw == 1 and pad == 0:               # 1x1 conv -> plain reshape
        xs = x if stride == 1 else x[:, ::stride, ::stride, :]
        OH, OW = xs.shape[1], xs.shape[2]
        return xs.reshape(N * OH * OW, C), (N, OH, OW)
    xp = jnp.pad(x, ((0, 0), (pad, pad), (pad, pad), (0, 0)))
    OH = (H + 2 * pad - kh) // stride + 1
    OW = (W + 2 * pad - kw) // stride + 1
    cols = [xp[:, i:i + stride * OH:stride, j:j + stride * OW:stride, :]
            for i in range(kh) for j in range(kw)]
    patches = jnp.stack(cols, axis=3)                  # (N, OH, OW, kh*kw, C)
    # TODO(synk): fold kh*kw into the matmul K-grid (in-kernel shifted-window
    # DMA of the padded NHWC tensor) to avoid materializing this kh*kw-amplified
    # patch matrix in HBM for 3x3/7x7 convs.
    return patches.reshape(N * OH * OW, kh * kw * C), (N, OH, OW)


def conv2d(x, w_mat, kh, kw, stride=1, pad=0, pre_bn=None, post_bn=None,
           residual=None, post_act=False, keep_padded=False):
    """Conv via im2col + fused Pallas matmul.

    x may carry zero-valued padded channels beyond the weight's Cin (padded-
    channel convention); the weight rows are zero-padded per tap to match.
    With keep_padded=True the (exactly zero) lane-padded output channels are
    retained so the next layer / pool avoids a slice + re-pad HBM round trip.
    """
    cphys = x.shape[-1]
    cout = w_mat.shape[1]
    cin = w_mat.shape[0] // (kh * kw)
    if cphys != cin:
        w_mat = jnp.pad(w_mat.reshape(kh * kw, cin, cout),
                        ((0, 0), (0, cphys - cin), (0, 0))
                        ).reshape(kh * kw * cphys, cout)
    patches, (n, oh, ow) = im2col(x, kh, kw, stride, pad)
    in_scale = in_bias = None
    if pre_bn is not None:
        s, b = pre_bn
        if cphys != cin:
            s = jnp.pad(s, (0, cphys - cin))
            b = jnp.pad(b, (0, cphys - cin))
        in_scale = jnp.tile(s, kh * kw)
        in_bias = jnp.tile(b, kh * kw)
    out_scale, out_bias = (post_bn if post_bn is not None else (None, None))
    res = (residual.reshape(n * oh * ow, residual.shape[-1])
           if residual is not None else None)
    out = fused_matmul(patches, w_mat, in_scale, in_bias, out_scale, out_bias,
                       res, post_act)
    if not keep_padded and out.shape[1] != cout:
        out = out[:, :cout]                            # drop lane padding
    return out.reshape(n, oh, ow, out.shape[1])


# ------------------------------ parameters ------------------------------------

class KeyGen:
    def __init__(self, seed):
        self._key = jax.random.PRNGKey(seed)

    def __call__(self):
        self._key, sub = jax.random.split(self._key)
        return sub


def conv_w(kg, kh, kw, cin, cout):
    std = (2.0 / (kh * kw * cin)) ** 0.5
    w = std * jax.random.normal(kg(), (kh, kw, cin, cout), jnp.float32)
    return w.reshape(kh * kw * cin, cout).astype(jnp.bfloat16)   # bf16 weights


def make_bn(kg, c, eps=1e-5):
    gamma = 1.0 + 0.1 * jax.random.normal(kg(), (c,), jnp.float32)
    beta = 0.1 * jax.random.normal(kg(), (c,), jnp.float32)
    mean = 0.1 * jax.random.normal(kg(), (c,), jnp.float32)
    var = 1.0 + 0.1 * jnp.abs(jax.random.normal(kg(), (c,), jnp.float32))
    scale = gamma / jnp.sqrt(var + eps)
    bias = beta - mean * scale
    return scale, bias


RESNET_CFG = ((64, 3, 1), (128, 4, 2), (256, 6, 2), (512, 3, 2))


def make_resnet50_params(kg):
    p = {"conv1": conv_w(kg, 7, 7, 3, 64), "bn1": make_bn(kg, 64)}
    inplanes = 64
    p["layers"] = []
    for planes, blocks, _stride in RESNET_CFG:
        stage = []
        for b in range(blocks):
            blk = {
                "conv1": conv_w(kg, 1, 1, inplanes, planes),
                "bn1": make_bn(kg, planes),
                "conv2": conv_w(kg, 3, 3, planes, planes),
                "bn2": make_bn(kg, planes),
                "conv3": conv_w(kg, 1, 1, planes, planes * 4),
                "bn3": make_bn(kg, planes * 4),
            }
            if b == 0:
                blk["down_w"] = conv_w(kg, 1, 1, inplanes, planes * 4)
                blk["down_bn"] = make_bn(kg, planes * 4)
            stage.append(blk)
            inplanes = planes * 4
        p["layers"].append(stage)
    return p


def make_densenet161_params(kg):
    growth, bn_size, init_f = 48, 4, 96
    cfg = (6, 12, 36, 24)
    p = {"conv0": conv_w(kg, 7, 7, 3, init_f), "bn0": make_bn(kg, init_f)}
    nf = init_f
    p["blocks"], p["transitions"] = [], []
    for i, nl in enumerate(cfg):
        layers = []
        for j in range(nl):
            cin = nf + j * growth
            layers.append({
                "bn1": make_bn(kg, cin),
                "conv1": conv_w(kg, 1, 1, cin, bn_size * growth),
                "bn2": make_bn(kg, bn_size * growth),
                "conv2": conv_w(kg, 3, 3, bn_size * growth, growth),
            })
        p["blocks"].append(layers)
        nf = nf + nl * growth
        if i != len(cfg) - 1:
            p["transitions"].append({
                "bn": make_bn(kg, nf),
                "conv": conv_w(kg, 1, 1, nf, nf // 2),
            })
            nf = nf // 2
    p["norm5"] = make_bn(kg, nf)   # nf == 2208
    return p


def make_params(seed=1):
    kg = KeyGen(seed)
    resnet = make_resnet50_params(kg)
    densenet = make_densenet161_params(kg)
    fc_in = 2048 + 2208            # 4256
    fc_w = (1.0 / fc_in ** 0.5) * jax.random.normal(kg(), (fc_in, 7), jnp.float32)
    fc_b = (1.0 / fc_in ** 0.5) * jax.random.normal(kg(), (7,), jnp.float32)
    return {"resnet": resnet, "densenet": densenet, "fc": (fc_w, fc_b)}


# -------------------------------- forwards ------------------------------------

def resnet50_forward(x, p):
    # Channel-padded end-to-end (keep_padded): padded channels are exactly 0.
    x = conv2d(x, p["conv1"], 7, 7, stride=2, pad=3, post_bn=p["bn1"],
               post_act=True, keep_padded=True)               # phys 128 (64)
    x = maxpool_3x3_s2(x)
    for stage, (_planes, _blocks, stage_stride) in zip(p["layers"], RESNET_CFG):
        for bidx, blk in enumerate(stage):
            s = stage_stride if bidx == 0 else 1
            identity = x
            out = conv2d(x, blk["conv1"], 1, 1, 1, 0, post_bn=blk["bn1"],
                         post_act=True, keep_padded=True)
            out = conv2d(out, blk["conv2"], 3, 3, s, 1, post_bn=blk["bn2"],
                         post_act=True, keep_padded=True)
            if "down_w" in blk:
                identity = conv2d(x, blk["down_w"], 1, 1, s, 0,
                                  post_bn=blk["down_bn"], keep_padded=True)
            out = conv2d(out, blk["conv3"], 1, 1, 1, 0, post_bn=blk["bn3"],
                         residual=identity, post_act=True, keep_padded=True)
            x = out
    return global_avgpool(x)                          # (N, 2048) f32


def densenet161_forward(x, p):
    c0 = p["conv0"].shape[1]                          # 96
    x = conv2d(x, p["conv0"], 7, 7, stride=2, pad=3, post_bn=p["bn0"],
               post_act=True, keep_padded=True)       # phys 128 (96 logical)
    x = maxpool_3x3_s2(x)[..., :c0]                   # back to logical channels
    for i, layers in enumerate(p["blocks"]):
        feats = x
        for lay in layers:
            # norm1+relu fused as pre-activation of the 1x1; norm2+relu fused
            # into its epilogue; the 1x1 output keeps its (zero) lane padding
            # so the 3x3 only needs zero-padded weight rows.
            y = conv2d(feats, lay["conv1"], 1, 1, 1, 0,
                       pre_bn=lay["bn1"], post_bn=lay["bn2"], post_act=True,
                       keep_padded=True)
            y = conv2d(y, lay["conv2"], 3, 3, 1, 1)
            # TODO(synk): replace per-layer concat with a preallocated channel
            # slab written via input_output_aliases (or scalar-prefetched K
            # offsets) to cut the O(L^2) HBM recopies of the growing features.
            feats = jnp.concatenate([feats, y], axis=-1)
        x = feats
        if i < len(p["transitions"]):
            t = p["transitions"][i]
            nf_half = t["conv"].shape[1]
            x = conv2d(x, t["conv"], 1, 1, 1, 0, pre_bn=t["bn"],
                       keep_padded=True)              # lane-dense pool input
            x = avgpool_2x2_s2(x)[..., :nf_half]      # slice the 4x-smaller map
    return global_avgpool(x, pre_bn=p["norm5"])       # norm5 + ReLU + pool


def hybrid_forward(x_nchw, params):
    x = jnp.transpose(x_nchw, (0, 2, 3, 1)).astype(jnp.bfloat16)  # NCHW -> NHWC
    r_feat = resnet50_forward(x, params["resnet"])                # (N, 2048)
    d_feat = densenet161_forward(x, params["densenet"])           # (N, 2208)
    combined = jnp.concatenate([r_feat, d_feat], axis=1)          # (N, 4256)
    # TODO(synk): nn.Dropout(p=0.5) implemented with eval-mode (identity) semantics.
    fc_w, fc_b = params["fc"]
    out = fused_matmul(combined, fc_w, out_bias=fc_b, out_dtype=jnp.float32)
    return out[:, :7]                                             # drop lane padding


# ---------------------------------- main ---------------------------------------

if __name__ == "__main__":
    # Smallest spatial size that keeps both backbones valid (x/32 downsampling).
    x = jax.random.normal(jax.random.PRNGKey(0), (2, 3, 32, 32), jnp.float32)
    params = make_params(seed=1)
    _pallas_maxpool_available()            # probe eagerly, outside the jit trace
    fwd = jax.jit(hybrid_forward)          # fuse the XLA-side glue around kernels
    out = jax.block_until_ready(fwd(x, params))
    assert out.shape == (2, 7) and out.dtype == jnp.float32
    print("KERNEL_OK")
</pallas_src>

<mosaic_0001>
module attributes {stable_mosaic.version = 11 : i64} {
  func.func @_max3x3_kernel(%arg0: i32, %arg1: memref<1x5x5x128xbf16, #tpu.memory_space<vmem>>, %arg2: memref<1x5x5x128xbf16, #tpu.memory_space<vmem>>, %arg3: memref<1x5x5x128xbf16, #tpu.memory_space<vmem>>, %arg4: memref<1x5x5x128xbf16, #tpu.memory_space<vmem>>, %arg5: memref<1x4x4x128xbf16, #tpu.memory_space<vmem>>) attributes {dimension_semantics = [#tpu.dimension_semantics<parallel>], iteration_bounds = array<i64: 2>, scalar_prefetch = 0 : i64, scratch_operands = 0 : i64, tpu.core_type = #tpu.core_type<tc>, window_params = [{transform_indices = @transform_0, window_bounds = array<i64: 1, 5, 5, 128>}, {transform_indices = @transform_1, window_bounds = array<i64: 1, 5, 5, 128>}, {transform_indices = @transform_2, window_bounds = array<i64: 1, 5, 5, 128>}, {transform_indices = @transform_3, window_bounds = array<i64: 1, 5, 5, 128>}, {transform_indices = @transform_4, window_bounds = array<i64: 1, 4, 4, 128>}]} {
    %c0 = arith.constant 0 : index
    %c0_0 = arith.constant 0 : index
    %c0_1 = arith.constant 0 : index
    %c0_2 = arith.constant 0 : index
    %0 = vector.load %arg1[%c0, %c0_0, %c0_1, %c0_2] : memref<1x5x5x128xbf16, #tpu.memory_space<vmem>>, vector<1x5x5x128xbf16>
    %1 = arith.extf %0 : vector<1x5x5x128xbf16> to vector<1x5x5x128xf32>
    %c0_3 = arith.constant 0 : index
    %c0_4 = arith.constant 0 : index
    %c0_5 = arith.constant 0 : index
    %c0_6 = arith.constant 0 : index
    %2 = vector.load %arg2[%c0_3, %c0_4, %c0_5, %c0_6] : memref<1x5x5x128xbf16, #tpu.memory_space<vmem>>, vector<1x5x5x128xbf16>
    %3 = arith.extf %2 : vector<1x5x5x128xbf16> to vector<1x5x5x128xf32>
    %c0_7 = arith.constant 0 : index
    %c0_8 = arith.constant 0 : index
    %c0_9 = arith.constant 0 : index
    %c0_10 = arith.constant 0 : index
    %4 = vector.load %arg3[%c0_7, %c0_8, %c0_9, %c0_10] : memref<1x5x5x128xbf16, #tpu.memory_space<vmem>>, vector<1x5x5x128xbf16>
    %5 = arith.extf %4 : vector<1x5x5x128xbf16> to vector<1x5x5x128xf32>
    %c0_11 = arith.constant 0 : index
    %c0_12 = arith.constant 0 : index
    %c0_13 = arith.constant 0 : index
    %c0_14 = arith.constant 0 : index
    %6 = vector.load %arg4[%c0_11, %c0_12, %c0_13, %c0_14] : memref<1x5x5x128xbf16, #tpu.memory_space<vmem>>, vector<1x5x5x128xbf16>
    %7 = arith.extf %6 : vector<1x5x5x128xbf16> to vector<1x5x5x128xf32>
    %8 = vector.extract_strided_slice %1 {offsets = [0, 0, 0, 0], sizes = [1, 4, 4, 128], strides = [1, 1, 1, 1]} : vector<1x5x5x128xf32> to vector<1x4x4x128xf32>
    %9 = vector.extract_strided_slice %3 {offsets = [0, 0, 0, 0], sizes = [1, 4, 4, 128], strides = [1, 1, 1, 1]} : vector<1x5x5x128xf32> to vector<1x4x4x128xf32>
    %10 = arith.maximumf %8, %9 : vector<1x4x4x128xf32>
    %11 = vector.extract_strided_slice %1 {offsets = [0, 0, 1, 0], sizes = [1, 4, 4, 128], strides = [1, 1, 1, 1]} : vector<1x5x5x128xf32> to vector<1x4x4x128xf32>
    %12 = arith.maximumf %10, %11 : vector<1x4x4x128xf32>
    %13 = vector.extract_strided_slice %5 {offsets = [0, 0, 0, 0], sizes = [1, 4, 4, 128], strides = [1, 1, 1, 1]} : vector<1x5x5x128xf32> to vector<1x4x4x128xf32>
    %14 = arith.maximumf %12, %13 : vector<1x4x4x128xf32>
    %15 = vector.extract_strided_slice %7 {offsets = [0, 0, 0, 0], sizes = [1, 4, 4, 128], strides = [1, 1, 1, 1]} : vector<1x5x5x128xf32> to vector<1x4x4x128xf32>
    %16 = arith.maximumf %14, %15 : vector<1x4x4x128xf32>
    %17 = vector.extract_strided_slice %5 {offsets = [0, 0, 1, 0], sizes = [1, 4, 4, 128], strides = [1, 1, 1, 1]} : vector<1x5x5x128xf32> to vector<1x4x4x128xf32>
    %18 = arith.maximumf %16, %17 : vector<1x4x4x128xf32>
    %19 = vector.extract_strided_slice %1 {offsets = [0, 1, 0, 0], sizes = [1, 4, 4, 128], strides = [1, 1, 1, 1]} : vector<1x5x5x128xf32> to vector<1x4x4x128xf32>
    %20 = arith.maximumf %18, %19 : vector<1x4x4x128xf32>
    %21 = vector.extract_strided_slice %3 {offsets = [0, 1, 0, 0], sizes = [1, 4, 4, 128], strides = [1, 1, 1, 1]} : vector<1x5x5x128xf32> to vector<1x4x4x128xf32>
    %22 = arith.maximumf %20, %21 : vector<1x4x4x128xf32>
    %23 = vector.extract_strided_slice %1 {offsets = [0, 1, 1, 0], sizes = [1, 4, 4, 128], strides = [1, 1, 1, 1]} : vector<1x5x5x128xf32> to vector<1x4x4x128xf32>
    %24 = arith.maximumf %22, %23 : vector<1x4x4x128xf32>
    %25 = arith.truncf %24 : vector<1x4x4x128xf32> to vector<1x4x4x128xbf16>
    %c0_15 = arith.constant 0 : index
    %c0_16 = arith.constant 0 : index
    %c0_17 = arith.constant 0 : index
    %c0_18 = arith.constant 0 : index
    %26 = vector.load %arg5[%c0_15, %c0_16, %c0_17, %c0_18] : memref<1x4x4x128xbf16, #tpu.memory_space<vmem>>, vector<1x4x4x128xbf16>
    tpu.vector_store %arg5[%c0_15, %c0_16, %c0_17, %c0_18], %25 {strides = array<i32>} : memref<1x4x4x128xbf16, #tpu.memory_space<vmem>>, vector<1x4x4x128xbf16>,
    return
  }
  func.func @transform_0(%arg0: i32) -> (i32, i32, i32, i32) {
    %c0_i32 = arith.constant 0 : i32
    %c0_i32_0 = arith.constant 0 : i32
    %c0_i32_1 = arith.constant 0 : i32
    %c0_i32_2 = arith.constant 0 : i32
    return %arg0, %c0_i32, %c0_i32_0, %c0_i32_1 : i32, i32, i32, i32
  }
  func.func @transform_1(%arg0: i32) -> (i32, i32, i32, i32) {
    %c0_i32 = arith.constant 0 : i32
    %c0_i32_0 = arith.constant 0 : i32
    %c0_i32_1 = arith.constant 0 : i32
    %c0_i32_2 = arith.constant 0 : i32
    return %arg0, %c0_i32, %c0_i32_0, %c0_i32_1 : i32, i32, i32, i32
  }
  func.func @transform_2(%arg0: i32) -> (i32, i32, i32, i32) {
    %c0_i32 = arith.constant 0 : i32
    %c0_i32_0 = arith.constant 0 : i32
    %c0_i32_1 = arith.constant 0 : i32
    %c0_i32_2 = arith.constant 0 : i32
    return %arg0, %c0_i32, %c0_i32_0, %c0_i32_1 : i32, i32, i32, i32
  }
  func.func @transform_3(%arg0: i32) -> (i32, i32, i32, i32) {
    %c0_i32 = arith.constant 0 : i32
    %c0_i32_0 = arith.constant 0 : i32
    %c0_i32_1 = arith.constant 0 : i32
    %c0_i32_2 = arith.constant 0 : i32
    return %arg0, %c0_i32, %c0_i32_0, %c0_i32_1 : i32, i32, i32, i32
  }
  func.func @transform_4(%arg0: i32) -> (i32, i32, i32, i32) {
    %c0_i32 = arith.constant 0 : i32
    %c0_i32_0 = arith.constant 0 : i32
    %c0_i32_1 = arith.constant 0 : i32
    %c0_i32_2 = arith.constant 0 : i32
    return %arg0, %c0_i32, %c0_i32_0, %c0_i32_1 : i32, i32, i32, i32
  }
}

module attributes {stable_mosaic.version = 11 : i64} {
  func.func @kernel(%arg0: i32, %arg1: i32, %arg2: i32, %arg3: memref<256x256xbf16, #tpu.memory_space<vmem>>, %arg4: memref<256x128xbf16, #tpu.memory_space<vmem>>, %arg5: memref<1x128xf32, #tpu.memory_space<vmem>>, %arg6: memref<1x128xf32, #tpu.memory_space<vmem>>, %arg7: memref<256x128xbf16, #tpu.memory_space<vmem>>, %arg8: memref<256x128xf32, #tpu.memory_space<vmem>>) attributes {dimension_semantics = [#tpu.dimension_semantics<parallel>, #tpu.dimension_semantics<parallel>, #tpu.dimension_semantics<arbitrary>], iteration_bounds = array<i64: 2, 1, 1>, scalar_prefetch = 0 : i64, scratch_operands = 1 : i64, tpu.core_type = #tpu.core_type<tc>, window_params = [{transform_indices = @transform_0, window_bounds = array<i64: 256, 256>}, {transform_indices = @transform_1, window_bounds = array<i64: 256, 128>}, {transform_indices = @transform_2, window_bounds = array<i64: 1, 128>}, {transform_indices = @transform_3, window_bounds = array<i64: 1, 128>}, {transform_indices = @transform_4, window_bounds = array<i64: 256, 128>}]} {
    %c0_i32 = arith.constant 0 : i32
    %0 = arith.cmpi eq, %arg2, %c0_i32 : i32
    %1 = arith.extui %0 : i1 to i32
    %c0_i32_0 = arith.constant 0 : i32
    %2 = arith.cmpi ne, %1, %c0_i32_0 : i32
    scf.if %2 {
      %cst_10 = arith.constant 0.000000e+00 : f32
      %12 = vector.broadcast %cst_10 : f32 to vector<256x128xf32>
      %c0_11 = arith.constant 0 : index
      %c0_12 = arith.constant 0 : index
      %13 = vector.load %arg8[%c0_11, %c0_12] : memref<256x128xf32, #tpu.memory_space<vmem>>, vector<256x128xf32>
      tpu.vector_store %arg8[%c0_11, %c0_12], %12 {strides = array<i32>} : memref<256x128xf32, #tpu.memory_space<vmem>>, vector<256x128xf32>,
    } else {
    }
    %c0 = arith.constant 0 : index
    %c0_1 = arith.constant 0 : index
    %3 = vector.load %arg3[%c0, %c0_1] : memref<256x256xbf16, #tpu.memory_space<vmem>>, vector<256x256xbf16>
    %c0_2 = arith.constant 0 : index
    %c0_3 = arith.constant 0 : index
    %4 = vector.load %arg8[%c0_2, %c0_3] : memref<256x128xf32, #tpu.memory_space<vmem>>, vector<256x128xf32>
    %c0_4 = arith.constant 0 : index
    %c0_5 = arith.constant 0 : index
    %5 = vector.load %arg4[%c0_4, %c0_5] : memref<256x128xbf16, #tpu.memory_space<vmem>>, vector<256x128xbf16>
    %cst = arith.constant dense<0.000000e+00> : vector<256x128xf32>
    %6 = tpu.matmul %3, %5, %cst {dimension_numbers = #tpu.dot_dimension_numbers<[1], [0], [0], [1], [0, 0, 1, 1], [], []>} : vector<256x256xbf16>, vector<256x128xbf16>, vector<256x128xf32> -> vector<256x128xf32>
    %7 = arith.addf %4, %6 : vector<256x128xf32>
    %c0_6 = arith.constant 0 : index
    %c0_7 = arith.constant 0 : index
    %8 = vector.load %arg8[%c0_6, %c0_7] : memref<256x128xf32, #tpu.memory_space<vmem>>, vector<256x128xf32>
    tpu.vector_store %arg8[%c0_6, %c0_7], %7 {strides = array<i32>} : memref<256x128xf32, #tpu.memory_space<vmem>>, vector<256x128xf32>,
    %c0_i32_8 = arith.constant 0 : i32
    %9 = arith.cmpi eq, %arg2, %c0_i32_8 : i32
    %10 = arith.extui %9 : i1 to i32
    %c0_i32_9 = arith.constant 0 : i32
    %11 = arith.cmpi ne, %10, %c0_i32_9 : i32
    scf.if %11 {
      %c0_10 = arith.constant 0 : index
      %c0_11 = arith.constant 0 : index
      %12 = vector.load %arg8[%c0_10, %c0_11] : memref<256x128xf32, #tpu.memory_space<vmem>>, vector<256x128xf32>
      %c0_12 = arith.constant 0 : index
      %c0_13 = arith.constant 0 : index
      %13 = vector.load %arg5[%c0_12, %c0_13] : memref<1x128xf32, #tpu.memory_space<vmem>>, vector<1x128xf32>
      %14 = vector.broadcast %13 : vector<1x128xf32> to vector<256x128xf32>
      %15 = arith.mulf %12, %14 : vector<256x128xf32>
      %c0_14 = arith.constant 0 : index
      %c0_15 = arith.constant 0 : index
      %16 = vector.load %arg6[%c0_14, %c0_15] : memref<1x128xf32, #tpu.memory_space<vmem>>, vector<1x128xf32>
      %17 = vector.broadcast %16 : vector<1x128xf32> to vector<256x128xf32>
      %18 = arith.addf %15, %17 : vector<256x128xf32>
      %cst_16 = arith.constant 0.000000e+00 : f32
      %19 = vector.broadcast %cst_16 : f32 to vector<256x128xf32>
      %20 = arith.maximumf %18, %19 : vector<256x128xf32>
      %21 = arith.truncf %20 : vector<256x128xf32> to vector<256x128xbf16>
      %c0_17 = arith.constant 0 : index
      %c0_18 = arith.constant 0 : index
      %22 = vector.load %arg7[%c0_17, %c0_18] : memref<256x128xbf16, #tpu.memory_space<vmem>>, vector<256x128xbf16>
      tpu.vector_store %arg7[%c0_17, %c0_18], %21 {strides = array<i32>} : memref<256x128xbf16, #tpu.memory_space<vmem>>, vector<256x128xbf16>,
    } else {
    }
    return
  }
  func.func @transform_0(%arg0: i32, %arg1: i32, %arg2: i32) -> (i32, i32) {
    %c0_i32 = arith.constant 0 : i32
    return %arg0, %arg2 : i32, i32
  }
  func.func @transform_1(%arg0: i32, %arg1: i32, %arg2: i32) -> (i32, i32) {
    %c0_i32 = arith.constant 0 : i32
    return %arg2, %arg1 : i32, i32
  }
  func.func @transform_2(%arg0: i32, %arg1: i32, %arg2: i32) -> (i32, i32) {
    %c0_i32 = arith.constant 0 : i32
    %c0_i32_0 = arith.constant 0 : i32
    return %c0_i32, %arg1 : i32, i32
  }
  func.func @transform_3(%arg0: i32, %arg1: i32, %arg2: i32) -> (i32, i32) {
    %c0_i32 = arith.constant 0 : i32
    %c0_i32_0 = arith.constant 0 : i32
    return %c0_i32, %arg1 : i32, i32
  }
  func.func @transform_4(%arg0: i32, %arg1: i32, %arg2: i32) -> (i32, i32) {
    %c0_i32 = arith.constant 0 : i32
    return %arg0, %arg1 : i32, i32
  }
}

</mosaic_0001>

<llo_original>
// kernel: tpu_custom_call.1
$region0: #{tpu_custom_call.1}
  #allocation0 [shape = 'u32[]', space=smem, size = 0x4, offset = 0x4, fixed_abs, tag = 'smem constant byte address 0x4 - core index']
  #allocation1 [shape = 'u32[144,128]{1,0:T(1,128)}', space=vmem, size = 0x12000, scoped, tag = 'internal scratch']
  %s0 = inlined_call_operand.hbm [shape: bf16[2,5,5,128], index: 0, kind: input, shape index: {}]
  %s1 = inlined_call_operand.hbm [shape: bf16[2,5,5,128], index: 1, kind: input, shape index: {}]
  %s2 = inlined_call_operand.hbm [shape: bf16[2,5,5,128], index: 2, kind: input, shape index: {}]
  %s3 = inlined_call_operand.hbm [shape: bf16[2,5,5,128], index: 3, kind: input, shape index: {}]
  %s4 = inlined_call_operand.hbm [shape: bf16[2,4,4,128], index: 4, kind: output, shape index: {}]
  %s5 = sld [smem:[#allocation0]]
  $region65: #{tpu_custom_call.1} parent=0
    _
  %s7 = ssub.s32 1, %s5
  %s8 = scalar_select 0, %s7, %s5
  $region1: #{tpu_custom_call.1} parent=0
    #allocation2 [shape = 'u8[20480]{0}', space=vmem, size = 0x5000, scoped, tag = 'input window, operand 0']
    #allocation3 [shape = 's32[2]{0}', space=sflag, size = 0x8, scoped, tag = 'scoped memory for tpu_custom_call.1']
    #allocation4 [shape = 's32[2]{0}', space=sflag, size = 0x8, scoped, tag = 'scoped memory for tpu_custom_call.1']
    #allocation5 [shape = 'u8[20480]{0}', space=vmem, size = 0x5000, scoped, tag = 'input window, operand 1']
    #allocation6 [shape = 's32[2]{0}', space=sflag, size = 0x8, scoped, tag = 'scoped memory for tpu_custom_call.1']
    #allocation7 [shape = 'u8[20480]{0}', space=vmem, size = 0x5000, scoped, tag = 'input window, operand 2']
    #allocation8 [shape = 'u8[20480]{0}', space=vmem, size = 0x5000, scoped, tag = 'input window, operand 3']
    #allocation9 [shape = 's32[2]{0}', space=sflag, size = 0x8, scoped, tag = 'scoped memory for tpu_custom_call.1']
    #allocation10 [shape = 'u8[8192]{0}', space=vmem, size = 0x2000, scoped, tag = 'output window, operand 0']
    %9 = vsyncpa [#allocation3], 0
    %s10 = scalar_lea.sflag [#allocation3], 1
    %11 = vsyncpa %s10, 0
    %12 = vsyncpa [#allocation6], 0
    %s13 = scalar_lea.sflag [#allocation6], 1
    %14 = vsyncpa %s13, 0
    %15 = vsyncpa [#allocation9], 0
    %s16 = scalar_lea.sflag [#allocation9], 1
    %17 = vsyncpa %s16, 0
    %18 = vsyncpa [#allocation4], 0
    %s19 = scalar_lea.sflag [#allocation4], 1
    %20 = vsyncpa %s19, 0
    loop: start=0, step=1, limit=4
    $region2: #{tpu_custom_call.1} parent=1 // loop_pre_header
      _
    $region3: #{tpu_custom_call.1} parent=1 // loop_header
      %s22 = sphi 0, %s26
      %p23 = scmp.ge.s32.totalorder %s22, 4
      %s32 = sphi 0, %s34
      %s35 = sphi 0, %s32
      %s36 = sphi 0, %s35
      %s52 = sphi 0, %s36
      %s58 = sphi 0, %s60
      %s61 = sphi 0, %s58
      %s62 = sphi 0, %s61
      %s78 = sphi 0, %s62
      %s84 = sphi 0, %s86
      %s87 = sphi 0, %s84
      %s88 = sphi 0, %s87
      %s104 = sphi 0, %s88
      %s110 = sphi 0, %s112
      %s113 = sphi 0, %s110
      %s114 = sphi 0, %s113
      %s130 = sphi 0, %s114
      %s136 = sphi 0, %s138
      %s139 = sphi 0, %s136
      %s140 = sphi 0, %s139
      %s156 = sphi 0, %s140
    $region4: #{tpu_custom_call.1} parent=1 // loop_header_branch
      %25 = sbr.rel (%p23) target = $region8
    $region5: #{tpu_custom_call.1} parent=1 // loop_body
      %s27 = ssub.s32 %s22, 1
      %s28 = ssub.s32 %s22, 2
      %s29 = sadd.s32 %s22, 1
      %s30 = ssub.s32 %s22, %s29
      %p31 = scmp.eq.s32.totalorder %s30, 0
      %s33 = sadd.s32 %s32, 1
      %s34 = scalar_select %p31, %s32, %s33
      %p37 = pneg %p31
      %p38 = scmp.eq.s32.totalorder %s22, 1
      %p39 = por %p37, %p38
      %p40 = scmp.ne.s32.totalorder %s32, %s35
      %p41 = scmp.eq.s32.totalorder %s22, 0
      %p42 = por %p40, %p41
      %p43 = scmp.ne.s32.totalorder %s32, %s35
      %p44 = scmp.eq.s32.totalorder %s27, 1
      %p45 = por %p43, %p44
      %p46 = scmp.ne.s32.totalorder %s35, %s36
      %p47 = scmp.eq.s32.totalorder %s27, 0
      %p48 = por %p46, %p47
      %p49 = scmp.ne.s32.totalorder %s35, %s36
      %p50 = scmp.eq.s32.totalorder %s28, 1
      %p51 = por %p49, %p50
      %p53 = scmp.ne.s32.totalorder %s36, %s52
      %p54 = scmp.eq.s32.totalorder %s28, 0
      %p55 = por %p53, %p54
      %s56 = ssub.s32 %s22, %s29
      %p57 = scmp.eq.s32.totalorder %s56, 0
      %s59 = sadd.s32 %s58, 1
      %s60 = scalar_select %p57, %s58, %s59
      %p63 = pneg %p57
      %p64 = scmp.eq.s32.totalorder %s22, 1
      %p65 = por %p63, %p64
      %p66 = scmp.ne.s32.totalorder %s58, %s61
      %p67 = scmp.eq.s32.totalorder %s22, 0
      %p68 = por %p66, %p67
      %p69 = scmp.ne.s32.totalorder %s58, %s61
      %p70 = scmp.eq.s32.totalorder %s27, 1
      %p71 = por %p69, %p70
      %p72 = scmp.ne.s32.totalorder %s61, %s62
      %p73 = scmp.eq.s32.totalorder %s27, 0
      %p74 = por %p72, %p73
      %p75 = scmp.ne.s32.totalorder %s61, %s62
      %p76 = scmp.eq.s32.totalorder %s28, 1
      %p77 = por %p75, %p76
      %p79 = scmp.ne.s32.totalorder %s62, %s78
      %p80 = scmp.eq.s32.totalorder %s28, 0
      %p81 = por %p79, %p80
      %s82 = ssub.s32 %s22, %s29
      %p83 = scmp.eq.s32.totalorder %s82, 0
      %s85 = sadd.s32 %s84, 1
      %s86 = scalar_select %p83, %s84, %s85
      %p89 = pneg %p83
      %p90 = scmp.eq.s32.totalorder %s22, 1
      %p91 = por %p89, %p90
      %p92 = scmp.ne.s32.totalorder %s84, %s87
      %p93 = scmp.eq.s32.totalorder %s22, 0
      %p94 = por %p92, %p93
      %p95 = scmp.ne.s32.totalorder %s84, %s87
      %p96 = scmp.eq.s32.totalorder %s27, 1
      %p97 = por %p95, %p96
      %p98 = scmp.ne.s32.totalorder %s87, %s88
      %p99 = scmp.eq.s32.totalorder %s27, 0
      %p100 = por %p98, %p99
      %p101 = scmp.ne.s32.totalorder %s87, %s88
      %p102 = scmp.eq.s32.totalorder %s28, 1
      %p103 = por %p101, %p102
      %p105 = scmp.ne.s32.totalorder %s88, %s104
      %p106 = scmp.eq.s32.totalorder %s28, 0
      %p107 = por %p105, %p106
      %s108 = ssub.s32 %s22, %s29
      %p109 = scmp.eq.s32.totalorder %s108, 0
      %s111 = sadd.s32 %s110, 1
      %s112 = scalar_select %p109, %s110, %s111
      %p115 = pneg %p109
      %p116 = scmp.eq.s32.totalorder %s22, 1
      %p117 = por %p115, %p116
      %p118 = scmp.ne.s32.totalorder %s110, %s113
      %p119 = scmp.eq.s32.totalorder %s22, 0
      %p120 = por %p118, %p119
      %p121 = scmp.ne.s32.totalorder %s110, %s113
      %p122 = scmp.eq.s32.totalorder %s27, 1
      %p123 = por %p121, %p122
      %p124 = scmp.ne.s32.totalorder %s113, %s114
      %p125 = scmp.eq.s32.totalorder %s27, 0
      %p126 = por %p124, %p125
      %p127 = scmp.ne.s32.totalorder %s113, %s114
      %p128 = scmp.eq.s32.totalorder %s28, 1
      %p129 = por %p127, %p128
      %p131 = scmp.ne.s32.totalorder %s114, %s130
      %p132 = scmp.eq.s32.totalorder %s28, 0
      %p133 = por %p131, %p132
      %s134 = ssub.s32 %s22, %s29
      %p135 = scmp.eq.s32.totalorder %s134, 0
      %s137 = sadd.s32 %s136, 1
      %s138 = scalar_select %p135, %s136, %s137
      %p141 = pneg %p135
      %p142 = scmp.eq.s32.totalorder %s22, 1
      %p143 = por %p141, %p142
      %p144 = scmp.ne.s32.totalorder %s136, %s139
      %p145 = scmp.eq.s32.totalorder %s22, 0
      %p146 = por %p144, %p145
      %p147 = scmp.ne.s32.totalorder %s136, %s139
      %p148 = scmp.eq.s32.totalorder %s27, 1
      %p149 = por %p147, %p148
      %p150 = scmp.ne.s32.totalorder %s139, %s140
      %p151 = scmp.eq.s32.totalorder %s27, 0
      %p152 = por %p150, %p151
      %p153 = scmp.ne.s32.totalorder %s139, %s140
      %p154 = scmp.eq.s32.totalorder %s28, 1
      %p155 = por %p153, %p154
      %p157 = scmp.ne.s32.totalorder %s140, %s156
      %p158 = scmp.eq.s32.totalorder %s28, 0
      %p159 = por %p157, %p158
      %p160 = scmp.le.s32.totalorder 1, %s22
      %p161 = scmp.lt.s32.totalorder %s22, 3
      %p162 = pnand %p160, %p161
      %p163 = pneg %p162
      // Predicated region
      $region9: #{tpu_custom_call.1} parent=5 // pred_check
        _
      $region10: #{tpu_custom_call.1} parent=5 // pred_check_branch
        %165 = sbr.rel (%p162) target = $region12
      $region11: #{tpu_custom_call.1} parent=5 // pred_region
        %s166 = ssub.s32 %s22, 1
      $region12: #{tpu_custom_call.1} parent=5 // pred_fallthru
        _
      %p167 = scmp.lt.s32.totalorder %s22, 2
      // Predicated region
      $region13: #{tpu_custom_call.1} parent=5 // pred_check
        %p168 = pneg %p167
      $region14: #{tpu_custom_call.1} parent=5 // pred_check_branch
        %170 = sbr.rel (%p168) target = $region16
      $region15: #{tpu_custom_call.1} parent=5 // pred_region
        // Predicated region
        $region17: #{tpu_custom_call.1} parent=15 // pred_check
          %p171 = pneg %p42
        $region18: #{tpu_custom_call.1} parent=15 // pred_check_branch
          %173 = sbr.rel (%p171) target = $region20
        $region19: #{tpu_custom_call.1} parent=15 // pred_region
          %s174 = sand.u32 %s32, 1
          %s175 = scalar_lea.sflag [#allocation3], %s174
          %s176 = sand.u32 %s32, 1
          %s177 = smul.addr %s176, 20
          %s178 = scalar_lea.vmem [#allocation2], %s177
          %s180 = ssub.s32 320, 320
          %181 = vsyncadd %s175, %s180
          %s182 = smul.addr %s22, 5
          %s183 = smul.addr %s182, 64
          %s184 = scalar_lea.hbm %s0, %s183
          %s185 = sshll.u32 %s178, 4
          %s186 = int_to_ptr.vmem [resolvable:$true] %s185
          %191 = dma.hbm_to_vmem [thread:$0]  %s184, 320, %s186, %s175, 64, 64, 4
        $region20: #{tpu_custom_call.1} parent=15 // pred_fallthru
          _
        // Predicated region
        $region21: #{tpu_custom_call.1} parent=15 // pred_check
          %p192 = pneg %p68
        $region22: #{tpu_custom_call.1} parent=15 // pred_check_branch
          %194 = sbr.rel (%p192) target = $region24
        $region23: #{tpu_custom_call.1} parent=15 // pred_region
          %s195 = sand.u32 %s22, 1
          %s196 = scalar_lea.sflag [#allocation6], %s195
          %s197 = sand.u32 %s58, 1
          %s198 = smul.addr %s197, 20
          %s199 = scalar_lea.vmem [#allocation5], %s198
          %s201 = ssub.s32 320, 320
          %202 = vsyncadd %s196, %s201
          %s203 = smul.addr %s22, 5
          %s204 = smul.addr %s203, 64
          %s205 = scalar_lea.hbm %s1, %s204
          %s206 = sshll.u32 %s199, 4
          %s207 = int_to_ptr.vmem [resolvable:$true] %s206
          %212 = dma.hbm_to_vmem [thread:$0]  %s205, 320, %s207, %s196, 64, 64, 4
        $region24: #{tpu_custom_call.1} parent=15 // pred_fallthru
          _
        // Predicated region
        $region25: #{tpu_custom_call.1} parent=15 // pred_check
          %p213 = pneg %p94
        $region26: #{tpu_custom_call.1} parent=15 // pred_check_branch
          %215 = sbr.rel (%p213) target = $region28
        $region27: #{tpu_custom_call.1} parent=15 // pred_region
          %s216 = sand.u32 %s22, 1
          %s217 = scalar_lea.sflag [#allocation6], %s216
          %s218 = sand.u32 %s84, 1
          %s219 = smul.addr %s218, 20
          %s220 = scalar_lea.vmem [#allocation7], %s219
          %s222 = ssub.s32 320, 320
          %223 = vsyncadd %s217, %s222
          %s224 = smul.addr %s22, 5
          %s225 = smul.addr %s224, 64
          %s226 = scalar_lea.hbm %s2, %s225
          %s227 = sshll.u32 %s220, 4
          %s228 = int_to_ptr.vmem [resolvable:$true] %s227
          %233 = dma.hbm_to_vmem [thread:$0]  %s226, 320, %s228, %s217, 64, 64, 4
        $region28: #{tpu_custom_call.1} parent=15 // pred_fallthru
          _
        // Predicated region
        $region29: #{tpu_custom_call.1} parent=15 // pred_check
          %p234 = pneg %p120
        $region30: #{tpu_custom_call.1} parent=15 // pred_check_branch
          %236 = sbr.rel (%p234) target = $region32
        $region31: #{tpu_custom_call.1} parent=15 // pred_region
          %s237 = sand.u32 %s110, 1
          %s238 = scalar_lea.sflag [#allocation9], %s237
          %s239 = sand.u32 %s110, 1
          %s240 = smul.addr %s239, 20
          %s241 = scalar_lea.vmem [#allocation8], %s240
          %s243 = ssub.s32 320, 320
          %244 = vsyncadd %s238, %s243
          %s245 = smul.addr %s22, 5
          %s246 = smul.addr %s245, 64
          %s247 = scalar_lea.hbm %s3, %s246
          %s248 = sshll.u32 %s241, 4
          %s249 = int_to_ptr.vmem [resolvable:$true] %s248
          %254 = dma.hbm_to_vmem [thread:$0]  %s247, 320, %s249, %s238, 64, 64, 4
        $region32: #{tpu_custom_call.1} parent=15 // pred_fallthru
          _
      $region16: #{tpu_custom_call.1} parent=5 // pred_fallthru
        _
      %p255 = scmp.le.s32.totalorder 1, %s22
      %p256 = scmp.lt.s32.totalorder %s22, 3
      %p257 = pnand %p255, %p256
      %p258 = pneg %p257
      // Predicated region
      $region33: #{tpu_custom_call.1} parent=5 // pred_check
        _
      $region34: #{tpu_custom_call.1} parent=5 // pred_check_branch
        %260 = sbr.rel (%p257) target = $region36
      $region35: #{tpu_custom_call.1} parent=5 // pred_region
        %s261 = ssub.s32 %s22, 1
        %s262 = sand.u32 %s35, 1
        %s263 = scalar_lea.sflag [#allocation3], %s262
        %s264 = sand.u32 %s35, 1
        %s265 = smul.addr %s264, 20
        %s266 = scalar_lea.vmem [#allocation2], %s265
        // Predicated region
        $region37: #{tpu_custom_call.1} parent=35 // pred_check
          %p267 = pneg %p48
        $region38: #{tpu_custom_call.1} parent=35 // pred_check_branch
          %269 = sbr.rel (%p267) target = $region40
        $region39: #{tpu_custom_call.1} parent=35 // pred_region
          %270 = dma.done %s263, 320
        $region40: #{tpu_custom_call.1} parent=35 // pred_fallthru
          _
        %s271 = sand.u32 %s27, 1
        %s272 = scalar_lea.sflag [#allocation6], %s271
        %s273 = sand.u32 %s61, 1
        %s274 = smul.addr %s273, 20
        %s275 = scalar_lea.vmem [#allocation5], %s274
        // Predicated region
        $region41: #{tpu_custom_call.1} parent=35 // pred_check
          %p276 = pneg %p74
        $region42: #{tpu_custom_call.1} parent=35 // pred_check_branch
          %278 = sbr.rel (%p276) target = $region44
        $region43: #{tpu_custom_call.1} parent=35 // pred_region
          %279 = dma.done %s272, 320
        $region44: #{tpu_custom_call.1} parent=35 // pred_fallthru
          _
        %s280 = sand.u32 %s27, 1
        %s281 = scalar_lea.sflag [#allocation6], %s280
        %s282 = sand.u32 %s87, 1
        %s283 = smul.addr %s282, 20
        %s284 = scalar_lea.vmem [#allocation7], %s283
        // Predicated region
        $region45: #{tpu_custom_call.1} parent=35 // pred_check
          %p285 = pneg %p100
        $region46: #{tpu_custom_call.1} parent=35 // pred_check_branch
          %287 = sbr.rel (%p285) target = $region48
        $region47: #{tpu_custom_call.1} parent=35 // pred_region
          %288 = dma.done %s281, 320
        $region48: #{tpu_custom_call.1} parent=35 // pred_fallthru
          _
        %s289 = sand.u32 %s113, 1
        %s290 = scalar_lea.sflag [#allocation9], %s289
        %s291 = sand.u32 %s113, 1
        %s292 = smul.addr %s291, 20
        %s293 = scalar_lea.vmem [#allocation8], %s292
        // Predicated region
        $region49: #{tpu_custom_call.1} parent=35 // pred_check
          %p294 = pneg %p126
        $region50: #{tpu_custom_call.1} parent=35 // pred_check_branch
          %296 = sbr.rel (%p294) target = $region52
        $region51: #{tpu_custom_call.1} parent=35 // pred_region
          %297 = dma.done %s290, 320
        $region52: #{tpu_custom_call.1} parent=35 // pred_fallthru
          _
        %s298 = sand.u32 %s35, 1
        %s299 = scalar_lea.sflag [#allocation3], %s298
        %s300 = sand.u32 %s35, 1
        %s301 = smul.addr %s300, 20
        %s302 = scalar_lea.vmem [#allocation2], %s301
        %p303 = pneg %p48
        %p304 = pneg %p45
        %s305 = sand.u32 %s27, 1
        %s306 = scalar_lea.sflag [#allocation6], %s305
        %s307 = sand.u32 %s61, 1
        %s308 = smul.addr %s307, 20
        %s309 = scalar_lea.vmem [#allocation5], %s308
        %p310 = pneg %p74
        %p311 = pneg %p71
        %s312 = sand.u32 %s27, 1
        %s313 = scalar_lea.sflag [#allocation6], %s312
        %s314 = sand.u32 %s87, 1
        %s315 = smul.addr %s314, 20
        %s316 = scalar_lea.vmem [#allocation7], %s315
        %p317 = pneg %p100
        %p318 = pneg %p97
        %s319 = sand.u32 %s113, 1
        %s320 = scalar_lea.sflag [#allocation9], %s319
        %s321 = sand.u32 %s113, 1
        %s322 = smul.addr %s321, 20
        %s323 = scalar_lea.vmem [#allocation8], %s322
        %p324 = pneg %p126
        %p325 = pneg %p123
        %p326 = pneg %p152
        %p327 = pneg %p149
        %s328 = sand.u32 %s139, 1
        %s329 = scalar_lea.sflag [#allocation4], %s328
        %s330 = sand.u32 %s139, 1
        %s331 = smul.addr %s330, 8
        %s332 = scalar_lea.vmem [#allocation10], %s331
        %v333 = vld [vmem:[%s266] sm:$0x7]
        %v334 = vld [vmem:[%s266 + $0x4] sm:$0x7]
        %v335 = vld [vmem:[%s266 + $0x8] sm:$0x7]
        %v336 = vld [vmem:[%s266 + $0xc] sm:$0x7]
        %v337 = vld [vmem:[%s266 + $0x10] sm:$0x7]
        %v338 = vunpack.c.l.bf16 %v333
        %v339 = vunpack.c.l.bf16 %v334
        %v340 = vunpack.c.l.bf16 %v335
        %v341 = vunpack.c.l.bf16 %v336
        %v342 = vunpack.c.l.bf16 %v337
        %v343 = vld [vmem:[%s275] sm:$0x7]
        %v344 = vld [vmem:[%s275 + $0x4] sm:$0x7]
        %v345 = vld [vmem:[%s275 + $0x8] sm:$0x7]
        %v346 = vld [vmem:[%s275 + $0xc] sm:$0x7]
        %v347 = vld [vmem:[%s275 + $0x10] sm:$0x7]
        %v348 = vunpack.c.l.bf16 %v343
        %v349 = vunpack.c.l.bf16 %v344
        %v350 = vunpack.c.l.bf16 %v345
        %v351 = vunpack.c.l.bf16 %v346
        %v352 = vunpack.c.l.bf16 %v347
        %v353 = vld [vmem:[%s284] sm:$0x7]
        %v354 = vld [vmem:[%s284 + $0x4] sm:$0x7]
        %v355 = vld [vmem:[%s284 + $0x8] sm:$0x7]
        %v356 = vld [vmem:[%s284 + $0xc] sm:$0x7]
        %v357 = vunpack.c.l.bf16 %v353
        %v358 = vunpack.c.l.bf16 %v354
        %v359 = vunpack.c.l.bf16 %v355
        %v360 = vunpack.c.l.bf16 %v356
        %v361 = vld [vmem:[%s293] sm:$0x7]
        %v362 = vld [vmem:[%s293 + $0x4] sm:$0x7]
        %v363 = vld [vmem:[%s293 + $0x8] sm:$0x7]
        %v364 = vld [vmem:[%s293 + $0xc] sm:$0x7]
        %v365 = vunpack.c.l.bf16 %v361
        %v366 = vunpack.c.l.bf16 %v362
        %v367 = vunpack.c.l.bf16 %v363
        %v368 = vunpack.c.l.bf16 %v364
        %v369 = vmax.f32 %v338, %v348
        %v370 = vmax.f32 %v339, %v349
        %v371 = vmax.f32 %v340, %v350
        %v372 = vmax.f32 %v341, %v351
        %v377 = vrot.slane %v338, 1
        %v378 = vrot.slane %v339, 1
        %v379 = vrot.slane %v340, 1
        %v380 = vrot.slane %v341, 1
        %v385 = vmax.f32 %v369, %v377
        %v386 = vmax.f32 %v370, %v378
        %v387 = vmax.f32 %v371, %v379
        %v388 = vmax.f32 %v372, %v380
        %v389 = vmax.f32 %v385, %v357
        %v390 = vmax.f32 %v386, %v358
        %v391 = vmax.f32 %v387, %v359
        %v392 = vmax.f32 %v388, %v360
        %v393 = vmax.f32 %v389, %v365
        %v394 = vmax.f32 %v390, %v366
        %v395 = vmax.f32 %v391, %v367
        %v396 = vmax.f32 %v392, %v368
        %v401 = vrot.slane %v357, 1
        %v402 = vrot.slane %v358, 1
        %v403 = vrot.slane %v359, 1
        %v404 = vrot.slane %v360, 1
        %v409 = vmax.f32 %v393, %v401
        %v410 = vmax.f32 %v394, %v402
        %v411 = vmax.f32 %v395, %v403
        %v412 = vmax.f32 %v396, %v404
        %v413 = vmax.f32 %v409, %v339
        %v414 = vmax.f32 %v410, %v340
        %v415 = vmax.f32 %v411, %v341
        %v416 = vmax.f32 %v412, %v342
        %v417 = vmax.f32 %v413, %v349
        %v418 = vmax.f32 %v414, %v350
        %v419 = vmax.f32 %v415, %v351
        %v420 = vmax.f32 %v416, %v352
        %v422 = vrot.slane %v342, 1
        %v424 = vmax.f32 %v417, %v378
        %v425 = vmax.f32 %v418, %v379
        %v426 = vmax.f32 %v419, %v380
        %v427 = vmax.f32 %v420, %v422
        %v428 = vpack.c.bf16 %v424, %v424
        %v429 = vpack.c.bf16 %v425, %v425
        %v430 = vpack.c.bf16 %v426, %v426
        %v431 = vpack.c.bf16 %v427, %v427
        %432 = vst [vmem:[%s332] sm:$0x3] %v428
        %433 = vst [vmem:[%s332 + $0x2] sm:$0x3] %v429
        %434 = vst [vmem:[%s332 + $0x4] sm:$0x3] %v430
        %435 = vst [vmem:[%s332 + $0x6] sm:$0x3] %v431
        %s436 = sand.u32 %s139, 1
        %s437 = scalar_lea.sflag [#allocation4], %s436
        %s438 = sand.u32 %s139, 1
        %s439 = smul.addr %s438, 8
        %s440 = scalar_lea.vmem [#allocation10], %s439
        // Predicated region
        $region53: #{tpu_custom_call.1} parent=35 // pred_check
          %p441 = pneg %p149
        $region54: #{tpu_custom_call.1} parent=35 // pred_check_branch
          %443 = sbr.rel (%p441) target = $region56
        $region55: #{tpu_custom_call.1} parent=35 // pred_region
          %s445 = ssub.s32 128, 128
          %446 = vsyncadd %s437, %s445
          %s447 = smul.addr %s27, 4
          %s448 = smul.addr %s447, 32
          %s449 = scalar_lea.hbm %s4, %s448
          %s450 = sshll.u32 %s440, 4
          %s451 = int_to_ptr.vmem [resolvable:$true] %s450
          %456 = dma.vmem_to_hbm [thread:$0]  %s451, 128, %s449, %s437, 32, 32, 2
        $region56: #{tpu_custom_call.1} parent=35 // pred_fallthru
          _
      $region36: #{tpu_custom_call.1} parent=5 // pred_fallthru
        _
      %p457 = scmp.le.s32.totalorder 2, %s22
      // Predicated region
      $region57: #{tpu_custom_call.1} parent=5 // pred_check
        %p458 = pneg %p457
      $region58: #{tpu_custom_call.1} parent=5 // pred_check_branch
        %460 = sbr.rel (%p458) target = $region60
      $region59: #{tpu_custom_call.1} parent=5 // pred_region
        %s461 = ssub.s32 %s22, 2
        // Predicated region
        $region61: #{tpu_custom_call.1} parent=59 // pred_check
          %p462 = pneg %p155
        $region62: #{tpu_custom_call.1} parent=59 // pred_check_branch
          %464 = sbr.rel (%p462) target = $region64
        $region63: #{tpu_custom_call.1} parent=59 // pred_region
          %s465 = sand.u32 %s140, 1
          %s466 = scalar_lea.sflag [#allocation4], %s465
          %s467 = sand.u32 %s140, 1
          %s468 = smul.addr %s467, 8
          %s469 = scalar_lea.vmem [#allocation10], %s468
          %470 = dma.done %s466, 128
        $region64: #{tpu_custom_call.1} parent=59 // pred_fallthru
          _
      $region60: #{tpu_custom_call.1} parent=5 // pred_fallthru
        _
    $region6: #{tpu_custom_call.1} parent=1 // loop_footer
      %s26 = sadd.s32 1, %s22
    $region7: #{tpu_custom_call.1} parent=1 // loop_footer_branch
      %21 = sbr.rel target = $region3
    $region8: #{tpu_custom_call.1} parent=1 // loop_exit
      _
    %471 = vsyncpa [#allocation3], 1
    %s472 = scalar_lea.sflag [#allocation3], 1
    %473 = vsyncpa %s472, 1
    %474 = vsyncpa [#allocation6], 1
    %s475 = scalar_lea.sflag [#allocation6], 1
    %476 = vsyncpa %s475, 1
    %477 = vsyncpa [#allocation9], 1
    %s478 = scalar_lea.sflag [#allocation9], 1
    %479 = vsyncpa %s478, 1
    %480 = vsyncpa [#allocation4], 1
    %s481 = scalar_lea.sflag [#allocation4], 1
    %482 = vsyncpa %s481, 1

// kernel: tpu_custom_call.1
$region0: #{tpu_custom_call.1}
  #allocation0 [shape = 'u32[]', space=smem, size = 0x4, offset = 0x4, fixed_abs, tag = 'smem constant byte address 0x4 - core index']
  #allocation1 [shape = 'u32[144,128]{1,0:T(1,128)}', space=vmem, size = 0x12000, scoped, tag = 'internal scratch']
  #allocation2 [shape = 'f32[256,128]{1,0:T(8,128)}', space=vmem, size = 0x20000, scoped, tag = 'scratch operand']
  %s0 = inlined_call_operand.hbm [shape: bf16[512,256], index: 0, kind: input, shape index: {}]
  %s1 = inlined_call_operand.hbm [shape: bf16[256,128], index: 1, kind: input, shape index: {}]
  %s2 = inlined_call_operand.hbm [shape: f32[1,128], index: 2, kind: input, shape index: {}]
  %s3 = inlined_call_operand.hbm [shape: f32[1,128], index: 3, kind: input, shape index: {}]
  %s4 = inlined_call_operand.hbm [shape: bf16[512,128], index: 4, kind: output, shape index: {}]
  %s5 = sld [smem:[#allocation0]]
  $region73: #{tpu_custom_call.1} parent=0
    _
  %s7 = ssub.s32 1, %s5
  %s8 = scalar_select 0, %s7, %s5
  $region1: #{tpu_custom_call.1} parent=0
    #allocation3 [shape = 'u8[262144]{0}', space=vmem, size = 0x40000, scoped, tag = 'input window, operand 0']
    #allocation4 [shape = 's32[2]{0}', space=sflag, size = 0x8, scoped, tag = 'scoped memory for tpu_custom_call.1']
    #allocation5 [shape = 's32[2]{0}', space=sflag, size = 0x8, scoped, tag = 'scoped memory for tpu_custom_call.1']
    #allocation6 [shape = 'u8[65536]{0}', space=vmem, size = 0x10000, scoped, tag = 'input window, operand 1, single buffered']
    #allocation7 [shape = 's32[1]{0}', space=sflag, size = 0x4, scoped, tag = 'scoped memory for tpu_custom_call.1']
    #allocation8 [shape = 'u8[512]{0}', space=vmem, size = 0x400, scoped, tag = 'input window, operand 2, single buffered']
    #allocation9 [shape = 'u8[512]{0}', space=vmem, size = 0x400, scoped, tag = 'input window, operand 3, single buffered']
    #allocation10 [shape = 's32[1]{0}', space=sflag, size = 0x4, scoped, tag = 'scoped memory for tpu_custom_call.1']
    #allocation11 [shape = 'u8[131072]{0}', space=vmem, size = 0x20000, scoped, tag = 'output window, operand 0']
    %9 = vsyncpa [#allocation4], 0
    %s10 = scalar_lea.sflag [#allocation4], 1
    %11 = vsyncpa %s10, 0
    %12 = vsyncpa [#allocation7], 0
    %13 = vsyncpa [#allocation10], 0
    %14 = vsyncpa [#allocation5], 0
    %s15 = scalar_lea.sflag [#allocation5], 1
    %16 = vsyncpa %s15, 0
    loop: start=0, step=1, limit=4
    $region2: #{tpu_custom_call.1} parent=1 // loop_pre_header
      _
    $region3: #{tpu_custom_call.1} parent=1 // loop_header
      %s18 = sphi 0, %s22
      %p19 = scmp.ge.s32.totalorder %s18, 4
      %s25 = sphi 0, %s44
      %s26 = sphi 0, %s40
      %s27 = sphi 0, %s36
      %s28 = sphi 0, %s25
      %s29 = sphi 0, %s26
      %s30 = sphi 0, %s27
      %s31 = sphi 0, %s28
      %s32 = sphi 0, %s29
      %s33 = sphi 0, %s30
      %s49 = sphi 0, %s51
      %s52 = sphi 0, %s49
      %s53 = sphi 0, %s52
      %s69 = sphi 0, %s53
      %s77 = sphi 0, %s79
      %s80 = sphi 0, %s77
      %s81 = sphi 0, %s80
      %s97 = sphi 0, %s81
      %s103 = sphi 0, %s105
      %s106 = sphi 0, %s103
      %s107 = sphi 0, %s106
      %s123 = sphi 0, %s107
      %s129 = sphi 0, %s131
      %s132 = sphi 0, %s129
      %s133 = sphi 0, %s132
      %s149 = sphi 0, %s133
      %s157 = sphi 0, %s159
      %s160 = sphi 0, %s157
      %s161 = sphi 0, %s160
      %s177 = sphi 0, %s161
    $region4: #{tpu_custom_call.1} parent=1 // loop_header_branch
      %21 = sbr.rel (%p19) target = $region8
    $region5: #{tpu_custom_call.1} parent=1 // loop_body
      %s23 = ssub.s32 %s18, 1
      %s24 = ssub.s32 %s18, 2
      %s34 = sadd.s32 1, %s27
      %p35 = scmp.ge.s32.totalorder %s34, 1
      %s36 = scalar_select %p35, 0, %s34
      %s37 = sadd.s32 1, %s26
      %s38 = scalar_select %p35, %s37, %s26
      %p39 = scmp.ge.s32.totalorder %s38, 1
      %s40 = scalar_select %p39, 0, %s38
      %s41 = sadd.s32 1, %s25
      %s42 = scalar_select %p39, %s41, %s25
      %p43 = scmp.ge.s32.totalorder %s42, 2
      %s44 = scalar_select %p43, 0, %s42
      %s45 = ssub.s32 %s25, %s44
      %s46 = ssub.s32 %s27, %s36
      %s47 = sor.u32 %s45, %s46
      %p48 = scmp.eq.s32.totalorder %s47, 0
      %s50 = sadd.s32 %s49, 1
      %s51 = scalar_select %p48, %s49, %s50
      %p54 = pneg %p48
      %p55 = scmp.eq.s32.totalorder %s18, 1
      %p56 = por %p54, %p55
      %p57 = scmp.ne.s32.totalorder %s49, %s52
      %p58 = scmp.eq.s32.totalorder %s18, 0
      %p59 = por %p57, %p58
      %p60 = scmp.ne.s32.totalorder %s49, %s52
      %p61 = scmp.eq.s32.totalorder %s23, 1
      %p62 = por %p60, %p61
      %p63 = scmp.ne.s32.totalorder %s52, %s53
      %p64 = scmp.eq.s32.totalorder %s23, 0
      %p65 = por %p63, %p64
      %p66 = scmp.ne.s32.totalorder %s52, %s53
      %p67 = scmp.eq.s32.totalorder %s24, 1
      %p68 = por %p66, %p67
      %p70 = scmp.ne.s32.totalorder %s53, %s69
      %p71 = scmp.eq.s32.totalorder %s24, 0
      %p72 = por %p70, %p71
      %s73 = ssub.s32 %s27, %s36
      %s74 = ssub.s32 %s26, %s40
      %s75 = sor.u32 %s73, %s74
      %p76 = scmp.eq.s32.totalorder %s75, 0
      %s78 = sadd.s32 %s77, 1
      %s79 = scalar_select %p76, %s77, %s78
      %p82 = pneg %p76
      %p83 = scmp.eq.s32.totalorder %s18, 1
      %p84 = por %p82, %p83
      %p85 = scmp.ne.s32.totalorder %s77, %s80
      %p86 = scmp.eq.s32.totalorder %s18, 0
      %p87 = por %p85, %p86
      %p88 = scmp.ne.s32.totalorder %s77, %s80
      %p89 = scmp.eq.s32.totalorder %s23, 1
      %p90 = por %p88, %p89
      %p91 = scmp.ne.s32.totalorder %s80, %s81
      %p92 = scmp.eq.s32.totalorder %s23, 0
      %p93 = por %p91, %p92
      %p94 = scmp.ne.s32.totalorder %s80, %s81
      %p95 = scmp.eq.s32.totalorder %s24, 1
      %p96 = por %p94, %p95
      %p98 = scmp.ne.s32.totalorder %s81, %s97
      %p99 = scmp.eq.s32.totalorder %s24, 0
      %p100 = por %p98, %p99
      %s101 = ssub.s32 %s26, %s40
      %p102 = scmp.eq.s32.totalorder %s101, 0
      %s104 = sadd.s32 %s103, 1
      %s105 = scalar_select %p102, %s103, %s104
      %p108 = pneg %p102
      %p109 = scmp.eq.s32.totalorder %s18, 1
      %p110 = por %p108, %p109
      %p111 = scmp.ne.s32.totalorder %s103, %s106
      %p112 = scmp.eq.s32.totalorder %s18, 0
      %p113 = por %p111, %p112
      %p114 = scmp.ne.s32.totalorder %s103, %s106
      %p115 = scmp.eq.s32.totalorder %s23, 1
      %p116 = por %p114, %p115
      %p117 = scmp.ne.s32.totalorder %s106, %s107
      %p118 = scmp.eq.s32.totalorder %s23, 0
      %p119 = por %p117, %p118
      %p120 = scmp.ne.s32.totalorder %s106, %s107
      %p121 = scmp.eq.s32.totalorder %s24, 1
      %p122 = por %p120, %p121
      %p124 = scmp.ne.s32.totalorder %s107, %s123
      %p125 = scmp.eq.s32.totalorder %s24, 0
      %p126 = por %p124, %p125
      %s127 = ssub.s32 %s26, %s40
      %p128 = scmp.eq.s32.totalorder %s127, 0
      %s130 = sadd.s32 %s129, 1
      %s131 = scalar_select %p128, %s129, %s130
      %p134 = pneg %p128
      %p135 = scmp.eq.s32.totalorder %s18, 1
      %p136 = por %p134, %p135
      %p137 = scmp.ne.s32.totalorder %s129, %s132
      %p138 = scmp.eq.s32.totalorder %s18, 0
      %p139 = por %p137, %p138
      %p140 = scmp.ne.s32.totalorder %s129, %s132
      %p141 = scmp.eq.s32.totalorder %s23, 1
      %p142 = por %p140, %p141
      %p143 = scmp.ne.s32.totalorder %s132, %s133
      %p144 = scmp.eq.s32.totalorder %s23, 0
      %p145 = por %p143, %p144
      %p146 = scmp.ne.s32.totalorder %s132, %s133
      %p147 = scmp.eq.s32.totalorder %s24, 1
      %p148 = por %p146, %p147
      %p150 = scmp.ne.s32.totalorder %s133, %s149
      %p151 = scmp.eq.s32.totalorder %s24, 0
      %p152 = por %p150, %p151
      %s153 = ssub.s32 %s25, %s44
      %s154 = ssub.s32 %s26, %s40
      %s155 = sor.u32 %s153, %s154
      %p156 = scmp.eq.s32.totalorder %s155, 0
      %s158 = sadd.s32 %s157, 1
      %s159 = scalar_select %p156, %s157, %s158
      %p162 = pneg %p156
      %p163 = scmp.eq.s32.totalorder %s18, 1
      %p164 = por %p162, %p163
      %p165 = scmp.ne.s32.totalorder %s157, %s160
      %p166 = scmp.eq.s32.totalorder %s18, 0
      %p167 = por %p165, %p166
      %p168 = scmp.ne.s32.totalorder %s157, %s160
      %p169 = scmp.eq.s32.totalorder %s23, 1
      %p170 = por %p168, %p169
      %p171 = scmp.ne.s32.totalorder %s160, %s161
      %p172 = scmp.eq.s32.totalorder %s23, 0
      %p173 = por %p171, %p172
      %p174 = scmp.ne.s32.totalorder %s160, %s161
      %p175 = scmp.eq.s32.totalorder %s24, 1
      %p176 = por %p174, %p175
      %p178 = scmp.ne.s32.totalorder %s161, %s177
      %p179 = scmp.eq.s32.totalorder %s24, 0
      %p180 = por %p178, %p179
      %p181 = scmp.le.s32.totalorder 1, %s18
      %p182 = scmp.lt.s32.totalorder %s18, 3
      %p183 = pnand %p181, %p182
      %p184 = pneg %p183
      // Predicated region
      $region9: #{tpu_custom_call.1} parent=5 // pred_check
        _
      $region10: #{tpu_custom_call.1} parent=5 // pred_check_branch
        %186 = sbr.rel (%p183) target = $region12
      $region11: #{tpu_custom_call.1} parent=5 // pred_region
        %s187 = ssub.s32 %s18, 1
        // Predicated region
        $region13: #{tpu_custom_call.1} parent=11 // pred_check
          %p188 = pneg %p93
        $region14: #{tpu_custom_call.1} parent=11 // pred_check_branch
          %190 = sbr.rel (%p188) target = $region16
        $region15: #{tpu_custom_call.1} parent=11 // pred_region
          %s191 = smul.u32 32, %s30
          %s193 = ssub.s32 2048, 2048
          %194 = vsyncadd [#allocation7], %s193
          %s195 = sadd.s32 %s29, %s191
          %s196 = smul.addr %s195, 64
          %s197 = scalar_lea.hbm %s1, %s196
          %s198 = sshll.u32 [#allocation6], 4
          %s199 = int_to_ptr.vmem [resolvable:$true] %s198
          %204 = dma.hbm_to_vmem [thread:$0]  %s197, 2048, %s199, [#allocation7], 64, 64, 4
        $region16: #{tpu_custom_call.1} parent=11 // pred_fallthru
          _
        // Predicated region
        $region17: #{tpu_custom_call.1} parent=11 // pred_check
          %p205 = pneg %p119
        $region18: #{tpu_custom_call.1} parent=11 // pred_check_branch
          %207 = sbr.rel (%p205) target = $region20
        $region19: #{tpu_custom_call.1} parent=11 // pred_region
          %s209 = ssub.s32 16, 16
          %210 = vsyncadd [#allocation7], %s209
          %s211 = smul.addr %s29, 16
          %s212 = scalar_lea.hbm %s2, %s211
          %s214 = sshll.u32 [#allocation8], 4
          %s215 = int_to_ptr.vmem [resolvable:$true] %s214
          %217 = dma.hbm_to_vmem [thread:$0]  %s212, 16, %s215, [#allocation7]
        $region20: #{tpu_custom_call.1} parent=11 // pred_fallthru
          _
        // Predicated region
        $region21: #{tpu_custom_call.1} parent=11 // pred_check
          %p218 = pneg %p145
        $region22: #{tpu_custom_call.1} parent=11 // pred_check_branch
          %220 = sbr.rel (%p218) target = $region24
        $region23: #{tpu_custom_call.1} parent=11 // pred_region
          %s222 = ssub.s32 16, 16
          %223 = vsyncadd [#allocation10], %s222
          %s224 = smul.addr %s29, 16
          %s225 = scalar_lea.hbm %s3, %s224
          %s227 = sshll.u32 [#allocation9], 4
          %s228 = int_to_ptr.vmem [resolvable:$true] %s227
          %230 = dma.hbm_to_vmem [thread:$0]  %s225, 16, %s228, [#allocation10]
        $region24: #{tpu_custom_call.1} parent=11 // pred_fallthru
          _
      $region12: #{tpu_custom_call.1} parent=5 // pred_fallthru
        _
      %p231 = scmp.lt.s32.totalorder %s18, 2
      // Predicated region
      $region25: #{tpu_custom_call.1} parent=5 // pred_check
        %p232 = pneg %p231
      $region26: #{tpu_custom_call.1} parent=5 // pred_check_branch
        %234 = sbr.rel (%p232) target = $region28
      $region27: #{tpu_custom_call.1} parent=5 // pred_region
        // Predicated region
        $region29: #{tpu_custom_call.1} parent=27 // pred_check
          %p235 = pneg %p59
        $region30: #{tpu_custom_call.1} parent=27 // pred_check_branch
          %237 = sbr.rel (%p235) target = $region32
        $region31: #{tpu_custom_call.1} parent=27 // pred_region
          %s238 = sand.u32 %s49, 1
          %s239 = scalar_lea.sflag [#allocation4], %s238
          %s240 = sand.u32 %s49, 1
          %s241 = smul.addr %s240, 256
          %s242 = scalar_lea.vmem [#allocation3], %s241
          %s243 = smul.u32 32, %s25
          %s244 = smul.u32 2, %s27
          %s246 = ssub.s32 4096, 4096
          %247 = vsyncadd %s239, %s246
          %s248 = smul.addr %s243, 2
          %s249 = sadd.s32 %s244, %s248
          %s250 = smul.addr %s249, 64
          %s251 = scalar_lea.hbm %s0, %s250
          %s252 = sshll.u32 %s242, 4
          %s253 = int_to_ptr.vmem [resolvable:$true] %s252
          %258 = dma.hbm_to_vmem [thread:$0]  %s251, 4096, %s253, %s239, 128, 128, 8
        $region32: #{tpu_custom_call.1} parent=27 // pred_fallthru
          _
      $region28: #{tpu_custom_call.1} parent=5 // pred_fallthru
        _
      %p259 = scmp.le.s32.totalorder 1, %s18
      %p260 = scmp.lt.s32.totalorder %s18, 3
      %p261 = pnand %p259, %p260
      %p262 = pneg %p261
      // Predicated region
      $region33: #{tpu_custom_call.1} parent=5 // pred_check
        _
      $region34: #{tpu_custom_call.1} parent=5 // pred_check_branch
        %264 = sbr.rel (%p261) target = $region36
      $region35: #{tpu_custom_call.1} parent=5 // pred_region
        %s265 = ssub.s32 %s18, 1
        %s266 = sand.u32 %s52, 1
        %s267 = scalar_lea.sflag [#allocation4], %s266
        %s268 = sand.u32 %s52, 1
        %s269 = smul.addr %s268, 256
        %s270 = scalar_lea.vmem [#allocation3], %s269
        // Predicated region
        $region37: #{tpu_custom_call.1} parent=35 // pred_check
          %p271 = pneg %p65
        $region38: #{tpu_custom_call.1} parent=35 // pred_check_branch
          %273 = sbr.rel (%p271) target = $region40
        $region39: #{tpu_custom_call.1} parent=35 // pred_region
          %274 = dma.done %s267, 4096
        $region40: #{tpu_custom_call.1} parent=35 // pred_fallthru
          _
        // Predicated region
        $region41: #{tpu_custom_call.1} parent=35 // pred_check
          %p275 = pneg %p93
        $region42: #{tpu_custom_call.1} parent=35 // pred_check_branch
          %277 = sbr.rel (%p275) target = $region44
        $region43: #{tpu_custom_call.1} parent=35 // pred_region
          %278 = dma.done [#allocation7], 2048
        $region44: #{tpu_custom_call.1} parent=35 // pred_fallthru
          _
        // Predicated region
        $region45: #{tpu_custom_call.1} parent=35 // pred_check
          %p279 = pneg %p119
        $region46: #{tpu_custom_call.1} parent=35 // pred_check_branch
          %281 = sbr.rel (%p279) target = $region48
        $region47: #{tpu_custom_call.1} parent=35 // pred_region
          %282 = dma.done [#allocation7], 16
        $region48: #{tpu_custom_call.1} parent=35 // pred_fallthru
          _
        // Predicated region
        $region49: #{tpu_custom_call.1} parent=35 // pred_check
          %p283 = pneg %p145
        $region50: #{tpu_custom_call.1} parent=35 // pred_check_branch
          %285 = sbr.rel (%p283) target = $region52
        $region51: #{tpu_custom_call.1} parent=35 // pred_region
          %286 = dma.done [#allocation10], 16
        $region52: #{tpu_custom_call.1} parent=35 // pred_fallthru
          _
        %s287 = sand.u32 %s52, 1
        %s288 = scalar_lea.sflag [#allocation4], %s287
        %s289 = sand.u32 %s52, 1
        %s290 = smul.addr %s289, 256
        %s291 = scalar_lea.vmem [#allocation3], %s290
        %p292 = pneg %p65
        %p293 = pneg %p62
        %p294 = pneg %p93
        %p295 = pneg %p90
        %p296 = pneg %p119
        %p297 = pneg %p116
        %p298 = pneg %p145
        %p299 = pneg %p142
        %p300 = pneg %p173
        %p301 = pneg %p170
        %s302 = sand.u32 %s160, 1
        %s303 = scalar_lea.sflag [#allocation5], %s302
        %s304 = sand.u32 %s160, 1
        %s305 = smul.addr %s304, 128
        %s306 = scalar_lea.vmem [#allocation11], %s305
        %s307 = smul.u32 32, %s28
        %s308 = smul.u32 2, %s30
        %s309 = smul.u32 32, %s30
        %s310 = smul.u32 32, %s28
        %p312 = scmp.eq.s32.totalorder %s30, 0
        // Predicated region
        $region53: #{tpu_custom_call.1} parent=35 // pred_check
          %p313 = pneg %p312
        $region54: #{tpu_custom_call.1} parent=35 // pred_check_branch
          %315 = sbr.rel (%p313) target = $region56
        $region55: #{tpu_custom_call.1} parent=35 // pred_region
          %316 = vst [vmem:[#allocation2] sm:$0xff] 0.0
          %317 = vst [vmem:[#allocation2 + $0x8] sm:$0xff] 0.0
          %318 = vst [vmem:[#allocation2 + $0x10] sm:$0xff] 0.0
          %319 = vst [vmem:[#allocation2 + $0x18] sm:$0xff] 0.0
          %320 = vst [vmem:[#allocation2 + $0x20] sm:$0xff] 0.0
          %321 = vst [vmem:[#allocation2 + $0x28] sm:$0xff] 0.0
          %322 = vst [vmem:[#allocation2 + $0x30] sm:$0xff] 0.0
          %323 = vst [vmem:[#allocation2 + $0x38] sm:$0xff] 0.0
          %324 = vst [vmem:[#allocation2 + $0x40] sm:$0xff] 0.0
          %325 = vst [vmem:[#allocation2 + $0x48] sm:$0xff] 0.0
          %326 = vst [vmem:[#allocation2 + $0x50] sm:$0xff] 0.0
          %327 = vst [vmem:[#allocation2 + $0x58] sm:$0xff] 0.0
          %328 = vst [vmem:[#allocation2 + $0x60] sm:$0xff] 0.0
          %329 = vst [vmem:[#allocation2 + $0x68] sm:$0xff] 0.0
          %330 = vst [vmem:[#allocation2 + $0x70] sm:$0xff] 0.0
          %331 = vst [vmem:[#allocation2 + $0x78] sm:$0xff] 0.0
          %332 = vst [vmem:[#allocation2 + $0x80] sm:$0xff] 0.0
          %333 = vst [vmem:[#allocation2 + $0x88] sm:$0xff] 0.0
          %334 = vst [vmem:[#allocation2 + $0x90] sm:$0xff] 0.0
          %335 = vst [vmem:[#allocation2 + $0x98] sm:$0xff] 0.0
          %336 = vst [vmem:[#allocation2 + $0xa0] sm:$0xff] 0.0
          %337 = vst [vmem:[#allocation2 + $0xa8] sm:$0xff] 0.0
          %338 = vst [vmem:[#allocation2 + $0xb0] sm:$0xff] 0.0
          %339 = vst [vmem:[#allocation2 + $0xb8] sm:$0xff] 0.0
          %340 = vst [vmem:[#allocation2 + $0xc0] sm:$0xff] 0.0
          %341 = vst [vmem:[#allocation2 + $0xc8] sm:$0xff] 0.0
          %342 = vst [vmem:[#allocation2 + $0xd0] sm:$0xff] 0.0
          %343 = vst [vmem:[#allocation2 + $0xd8] sm:$0xff] 0.0
          %344 = vst [vmem:[#allocation2 + $0xe0] sm:$0xff] 0.0
          %345 = vst [vmem:[#allocation2 + $0xe8] sm:$0xff] 0.0
          %346 = vst [vmem:[#allocation2 + $0xf0] sm:$0xff] 0.0
          %347 = vst [vmem:[#allocation2 + $0xf8] sm:$0xff] 0.0
        $region56: #{tpu_custom_call.1} parent=35 // pred_fallthru
          _
        %v348 = vld [vmem:[%s270] sm:$0xff]
        %v349 = vld [vmem:[%s270 + $0x8] sm:$0xff]
        %v350 = vld [vmem:[%s270 + $0x10] sm:$0xff]
        %v351 = vld [vmem:[%s270 + $0x18] sm:$0xff]
        %v352 = vld [vmem:[%s270 + $0x20] sm:$0xff]
        %v353 = vld [vmem:[%s270 + $0x28] sm:$0xff]
        %v354 = vld [vmem:[%s270 + $0x30] sm:$0xff]
        %v355 = vld [vmem:[%s270 + $0x38] sm:$0xff]
        %v356 = vld [vmem:[%s270 + $0x40] sm:$0xff]
        %v357 = vld [vmem:[%s270 + $0x48] sm:$0xff]
        %v358 = vld [vmem:[%s270 + $0x50] sm:$0xff]
        %v359 = vld [vmem:[%s270 + $0x58] sm:$0xff]
        %v360 = vld [vmem:[%s270 + $0x60] sm:$0xff]
        %v361 = vld [vmem:[%s270 + $0x68] sm:$0xff]
        %v362 = vld [vmem:[%s270 + $0x70] sm:$0xff]
        %v363 = vld [vmem:[%s270 + $0x78] sm:$0xff]
        %v364 = vld [vmem:[%s270 + $0x80] sm:$0xff]
        %v365 = vld [vmem:[%s270 + $0x88] sm:$0xff]
        %v366 = vld [vmem:[%s270 + $0x90] sm:$0xff]
        %v367 = vld [vmem:[%s270 + $0x98] sm:$0xff]
        %v368 = vld [vmem:[%s270 + $0xa0] sm:$0xff]
        %v369 = vld [vmem:[%s270 + $0xa8] sm:$0xff]
        %v370 = vld [vmem:[%s270 + $0xb0] sm:$0xff]
        %v371 = vld [vmem:[%s270 + $0xb8] sm:$0xff]
        %v372 = vld [vmem:[%s270 + $0xc0] sm:$0xff]
        %v373 = vld [vmem:[%s270 + $0xc8] sm:$0xff]
        %v374 = vld [vmem:[%s270 + $0xd0] sm:$0xff]
        %v375 = vld [vmem:[%s270 + $0xd8] sm:$0xff]
        %v376 = vld [vmem:[%s270 + $0xe0] sm:$0xff]
        %v377 = vld [vmem:[%s270 + $0xe8] sm:$0xff]
        %v378 = vld [vmem:[%s270 + $0xf0] sm:$0xff]
        %v379 = vld [vmem:[%s270 + $0xf8] sm:$0xff]
        %v380 = vld [vmem:[#allocation2] sm:$0xff]
        %v381 = vld [vmem:[#allocation2 + $0x8] sm:$0xff]
        %v382 = vld [vmem:[#allocation2 + $0x10] sm:$0xff]
        %v383 = vld [vmem:[#allocation2 + $0x18] sm:$0xff]
        %v384 = vld [vmem:[#allocation2 + $0x20] sm:$0xff]
        %v385 = vld [vmem:[#allocation2 + $0x28] sm:$0xff]
        %v386 = vld [vmem:[#allocation2 + $0x30] sm:$0xff]
        %v387 = vld [vmem:[#allocation2 + $0x38] sm:$0xff]
        %v388 = vld [vmem:[#allocation2 + $0x40] sm:$0xff]
        %v389 = vld [vmem:[#allocation2 + $0x48] sm:$0xff]
        %v390 = vld [vmem:[#allocation2 + $0x50] sm:$0xff]
        %v391 = vld [vmem:[#allocation2 + $0x58] sm:$0xff]
        %v392 = vld [vmem:[#allocation2 + $0x60] sm:$0xff]
        %v393 = vld [vmem:[#allocation2 + $0x68] sm:$0xff]
        %v394 = vld [vmem:[#allocation2 + $0x70] sm:$0xff]
        %v395 = vld [vmem:[#allocation2 + $0x78] sm:$0xff]
        %v396 = vld [vmem:[#allocation2 + $0x80] sm:$0xff]
        %v397 = vld [vmem:[#allocation2 + $0x88] sm:$0xff]
        %v398 = vld [vmem:[#allocation2 + $0x90] sm:$0xff]
        %v399 = vld [vmem:[#allocation2 + $0x98] sm:$0xff]
        %v400 = vld [vmem:[#allocation2 + $0xa0] sm:$0xff]
        %v401 = vld [vmem:[#allocation2 + $0xa8] sm:$0xff]
        %v402 = vld [vmem:[#allocation2 + $0xb0] sm:$0xff]
        %v403 = vld [vmem:[#allocation2 + $0xb8] sm:$0xff]
        %v404 = vld [vmem:[#allocation2 + $0xc0] sm:$0xff]
        %v405 = vld [vmem:[#allocation2 + $0xc8] sm:$0xff]
        %v406 = vld [vmem:[#allocation2 + $0xd0] sm:$0xff]
        %v407 = vld [vmem:[#allocation2 + $0xd8] sm:$0xff]
        %v408 = vld [vmem:[#allocation2 + $0xe0] sm:$0xff]
        %v409 = vld [vmem:[#allocation2 + $0xe8] sm:$0xff]
        %v410 = vld [vmem:[#allocation2 + $0xf0] sm:$0xff]
        %v411 = vld [vmem:[#allocation2 + $0xf8] sm:$0xff]
        %v412 = vld [vmem:[#allocation6] sm:$0xf]
        %v413 = vld [vmem:[#allocation6 + $0x4] sm:$0xf]
        %v414 = vld [vmem:[#allocation6 + $0x8] sm:$0xf]
        %v415 = vld [vmem:[#allocation6 + $0xc] sm:$0xf]
        %v416 = vld [vmem:[#allocation6 + $0x10] sm:$0xf]
        %v417 = vld [vmem:[#allocation6 + $0x14] sm:$0xf]
        %v418 = vld [vmem:[#allocation6 + $0x18] sm:$0xf]
        %v419 = vld [vmem:[#allocation6 + $0x1c] sm:$0xf]
        %v420 = vld [vmem:[#allocation6 + $0x20] sm:$0xf]
        %v421 = vld [vmem:[#allocation6 + $0x24] sm:$0xf]
        %v422 = vld [vmem:[#allocation6 + $0x28] sm:$0xf]
        %v423 = vld [vmem:[#allocation6 + $0x2c] sm:$0xf]
        %v424 = vld [vmem:[#allocation6 + $0x30] sm:$0xf]
        %v425 = vld [vmem:[#allocation6 + $0x34] sm:$0xf]
        %v426 = vld [vmem:[#allocation6 + $0x38] sm:$0xf]
        %v427 = vld [vmem:[#allocation6 + $0x3c] sm:$0xf]
        %v428 = vld [vmem:[#allocation6 + $0x40] sm:$0xf]
        %v429 = vld [vmem:[#allocation6 + $0x44] sm:$0xf]
        %v430 = vld [vmem:[#allocation6 + $0x48] sm:$0xf]
        %v431 = vld [vmem:[#allocation6 + $0x4c] sm:$0xf]
        %v432 = vld [vmem:[#allocation6 + $0x50] sm:$0xf]
        %v433 = vld [vmem:[#allocation6 + $0x54] sm:$0xf]
        %v434 = vld [vmem:[#allocation6 + $0x58] sm:$0xf]
        %v435 = vld [vmem:[#allocation6 + $0x5c] sm:$0xf]
        %v436 = vld [vmem:[#allocation6 + $0x60] sm:$0xf]
        %v437 = vld [vmem:[#allocation6 + $0x64] sm:$0xf]
        %v438 = vld [vmem:[#allocation6 + $0x68] sm:$0xf]
        %v439 = vld [vmem:[#allocation6 + $0x6c] sm:$0xf]
        %v440 = vld [vmem:[#allocation6 + $0x70] sm:$0xf]
        %v441 = vld [vmem:[#allocation6 + $0x74] sm:$0xf]
        %v442 = vld [vmem:[#allocation6 + $0x78] sm:$0xf]
        %v443 = vld [vmem:[#allocation6 + $0x7c] sm:$0xf]
        %v476 = vunpack.c.l.b16 %v348
        %v477 = vunpack.c.h.b16 %v348
        %v478 = vunpack.c.l.b16 %v349
        %v479 = vunpack.c.h.b16 %v349
        %v480 = vunpack.c.l.b16 %v350
        %v481 = vunpack.c.h.b16 %v350
        %v482 = vunpack.c.l.b16 %v351
        %v483 = vunpack.c.h.b16 %v351
        %v484 = vunpack.c.l.b16 %v352
        %v485 = vunpack.c.h.b16 %v352
        %v486 = vunpack.c.l.b16 %v353
        %v487 = vunpack.c.h.b16 %v353
        %v488 = vunpack.c.l.b16 %v354
        %v489 = vunpack.c.h.b16 %v354
        %v490 = vunpack.c.l.b16 %v355
        %v491 = vunpack.c.h.b16 %v355
        %v492 = vunpack.c.l.b16 %v356
        %v493 = vunpack.c.h.b16 %v356
        %v494 = vunpack.c.l.b16 %v357
        %v495 = vunpack.c.h.b16 %v357
        %v496 = vunpack.c.l.b16 %v358
        %v497 = vunpack.c.h.b16 %v358
        %v498 = vunpack.c.l.b16 %v359
        %v499 = vunpack.c.h.b16 %v359
        %v500 = vunpack.c.l.b16 %v360
        %v501 = vunpack.c.h.b16 %v360
        %v502 = vunpack.c.l.b16 %v361
        %v503 = vunpack.c.h.b16 %v361
        %v504 = vunpack.c.l.b16 %v362
        %v505 = vunpack.c.h.b16 %v362
        %v506 = vunpack.c.l.b16 %v363
        %v507 = vunpack.c.h.b16 %v363
        %v508 = vunpack.c.l.b16 %v364
        %v509 = vunpack.c.h.b16 %v364
        %v510 = vunpack.c.l.b16 %v365
        %v511 = vunpack.c.h.b16 %v365
        %v512 = vunpack.c.l.b16 %v366
        %v513 = vunpack.c.h.b16 %v366
        %v514 = vunpack.c.l.b16 %v367
        %v515 = vunpack.c.h.b16 %v367
        %v516 = vunpack.c.l.b16 %v368
        %v517 = vunpack.c.h.b16 %v368
        %v518 = vunpack.c.l.b16 %v369
        %v519 = vunpack.c.h.b16 %v369
        %v520 = vunpack.c.l.b16 %v370
        %v521 = vunpack.c.h.b16 %v370
        %v522 = vunpack.c.l.b16 %v371
        %v523 = vunpack.c.h.b16 %v371
        %v524 = vunpack.c.l.b16 %v372
        %v525 = vunpack.c.h.b16 %v372
        %v526 = vunpack.c.l.b16 %v373
        %v527 = vunpack.c.h.b16 %v373
        %v528 = vunpack.c.l.b16 %v374
        %v529 = vunpack.c.h.b16 %v374
        %v530 = vunpack.c.l.b16 %v375
        %v531 = vunpack.c.h.b16 %v375
        %v532 = vunpack.c.l.b16 %v376
        %v533 = vunpack.c.h.b16 %v376
        %v534 = vunpack.c.l.b16 %v377
        %v535 = vunpack.c.h.b16 %v377
        %v536 = vunpack.c.l.b16 %v378
        %v537 = vunpack.c.h.b16 %v378
        %v538 = vunpack.c.l.b16 %v379
        %v539 = vunpack.c.h.b16 %v379
        %v540 = vpack.c.b16 %v478, %v476
        %v541 = vpack.c.b16 %v479, %v477
        %v542 = vpack.c.b16 %v482, %v480
        %v543 = vpack.c.b16 %v483, %v481
        %v544 = vpack.c.b16 %v486, %v484
        %v545 = vpack.c.b16 %v487, %v485
        %v546 = vpack.c.b16 %v490, %v488
        %v547 = vpack.c.b16 %v491, %v489
        %v548 = vpack.c.b16 %v494, %v492
        %v549 = vpack.c.b16 %v495, %v493
        %v550 = vpack.c.b16 %v498, %v496
        %v551 = vpack.c.b16 %v499, %v497
        %v552 = vpack.c.b16 %v502, %v500
        %v553 = vpack.c.b16 %v503, %v501
        %v554 = vpack.c.b16 %v506, %v504
        %v555 = vpack.c.b16 %v507, %v505
        %v556 = vpack.c.b16 %v510, %v508
        %v557 = vpack.c.b16 %v511, %v509
        %v558 = vpack.c.b16 %v514, %v512
        %v559 = vpack.c.b16 %v515, %v513
        %v560 = vpack.c.b16 %v518, %v516
        %v561 = vpack.c.b16 %v519, %v517
        %v562 = vpack.c.b16 %v522, %v520
        %v563 = vpack.c.b16 %v523, %v521
        %v564 = vpack.c.b16 %v526, %v524
        %v565 = vpack.c.b16 %v527, %v525
        %v566 = vpack.c.b16 %v530, %v528
        %v567 = vpack.c.b16 %v531, %v529
        %v568 = vpack.c.b16 %v534, %v532
        %v569 = vpack.c.b16 %v535, %v533
        %v570 = vpack.c.b16 %v538, %v536
        %v571 = vpack.c.b16 %v539, %v537
        %v636 = vunpack.c.l.b16 %v412
        %v637 = vunpack.c.l.b16 %v413
        %v638 = vunpack.c.l.b16 %v414
        %v639 = vunpack.c.l.b16 %v415
        %v640 = vunpack.c.l.b16 %v416
        %v641 = vunpack.c.l.b16 %v417
        %v642 = vunpack.c.l.b16 %v418
        %v643 = vunpack.c.l.b16 %v419
        %v644 = vunpack.c.l.b16 %v420
        %v645 = vunpack.c.l.b16 %v421
        %v646 = vunpack.c.l.b16 %v422
        %v647 = vunpack.c.l.b16 %v423
        %v648 = vunpack.c.l.b16 %v424
        %v649 = vunpack.c.l.b16 %v425
        %v650 = vunpack.c.l.b16 %v426
        %v651 = vunpack.c.l.b16 %v427
        %v652 = vunpack.c.l.b16 %v428
        %v653 = vunpack.c.l.b16 %v429
        %v654 = vunpack.c.l.b16 %v430
        %v655 = vunpack.c.l.b16 %v431
        %v656 = vunpack.c.l.b16 %v432
        %v657 = vunpack.c.l.b16 %v433
        %v658 = vunpack.c.l.b16 %v434
        %v659 = vunpack.c.l.b16 %v435
        %v660 = vunpack.c.l.b16 %v436
        %v661 = vunpack.c.l.b16 %v437
        %v662 = vunpack.c.l.b16 %v438
        %v663 = vunpack.c.l.b16 %v439
        %v664 = vunpack.c.l.b16 %v440
        %v665 = vunpack.c.l.b16 %v441
        %v666 = vunpack.c.l.b16 %v442
        %v667 = vunpack.c.l.b16 %v443
        %v668 = vpack.c.b16 %v637, %v636
        %v669 = vpack.c.b16 %v639, %v638
        %v670 = vpack.c.b16 %v641, %v640
        %v671 = vpack.c.b16 %v643, %v642
        %v672 = vpack.c.b16 %v645, %v644
        %v673 = vpack.c.b16 %v647, %v646
        %v674 = vpack.c.b16 %v649, %v648
        %v675 = vpack.c.b16 %v651, %v650
        %v676 = vpack.c.b16 %v653, %v652
        %v677 = vpack.c.b16 %v655, %v654
        %v678 = vpack.c.b16 %v657, %v656
        %v679 = vpack.c.b16 %v659, %v658
        %v680 = vpack.c.b16 %v661, %v660
        %v681 = vpack.c.b16 %v663, %v662
        %v682 = vpack.c.b16 %v665, %v664
        %v683 = vpack.c.b16 %v667, %v666
        %700 = vmatprep.subr.bf16.mxu0 0
        %701 = vmatpush1.bf16.msra.mxu0 %v668
        %702 = vmatprep.subr.bf16.mxu0 0
        %703 = vmatpush1.bf16.msra.mxu0 %v669
        %704 = vmatprep.subr.bf16.mxu0 0
        %705 = vmatpush1.bf16.msra.mxu0 %v670
        %706 = vmatprep.subr.bf16.mxu0 0
        %707 = vmatpush1.bf16.msra.mxu0 %v671
        %708 = vmatprep.subr.bf16.mxu0 0
        %709 = vmatpush1.bf16.msra.mxu0 %v672
        %710 = vmatprep.subr.bf16.mxu0 0
        %711 = vmatpush1.bf16.msra.mxu0 %v673
        %712 = vmatprep.subr.bf16.mxu0 0
        %713 = vmatpush1.bf16.msra.mxu0 %v674
        %714 = vmatprep.subr.bf16.mxu0 0
        %715 = vmatpush1.bf16.msra.mxu0 %v675
        %716 = vmatprep.subr.bf16.mxu0 0
        %717 = vmatpush1.bf16.msra.mxu0 %v676
        %718 = vmatprep.subr.bf16.mxu0 0
        %719 = vmatpush1.bf16.msra.mxu0 %v677
        %720 = vmatprep.subr.bf16.mxu0 0
        %721 = vmatpush1.bf16.msra.mxu0 %v678
        %722 = vmatprep.subr.bf16.mxu0 0
        %723 = vmatpush1.bf16.msra.mxu0 %v679
        %724 = vmatprep.subr.bf16.mxu0 0
        %725 = vmatpush1.bf16.msra.mxu0 %v680
        %726 = vmatprep.subr.bf16.mxu0 0
        %727 = vmatpush1.bf16.msra.mxu0 %v681
        %728 = vmatprep.subr.bf16.mxu0 0
        %729 = vmatpush1.bf16.msra.mxu0 %v682
        %730 = vmatprep.subr.bf16.mxu0 0
        %731 = vmatpush1.bf16.msra.mxu0 %v683
        %732 = vmatprep.mubr.bf16.mxu0 %v541
        %733 = vmatmul.mubr.bf16.gmra.mrb[0].mxu0 %v540
        %v734 = vpop.f32.mrb[0].mxu0
        %v735 = vadd.f32 0.0, %v734
        %v736 = vpop.f32.mrb[0].mxu0
        %v737 = vpop.f32.mrb[0].mxu0
        %v738 = vadd.f32 0.0, %v737
        %v739 = vpop.f32.mrb[0].mxu0
        %740 = vmatprep.mubr.bf16.mxu0 %v543
        %741 = vmatmul.mubr.bf16.gmra.mrb[0].mxu0 %v542
        %v742 = vpop.f32.mrb[0].mxu0
        %v743 = vadd.f32 0.0, %v742
        %v744 = vpop.f32.mrb[0].mxu0
        %v745 = vpop.f32.mrb[0].mxu0
        %v746 = vadd.f32 0.0, %v745
        %v747 = vpop.f32.mrb[0].mxu0
        %748 = vmatprep.mubr.bf16.mxu0 %v545
        %749 = vmatmul.mubr.bf16.gmra.mrb[0].mxu0 %v544
        %v750 = vpop.f32.mrb[0].mxu0
        %v751 = vadd.f32 0.0, %v750
        %v752 = vpop.f32.mrb[0].mxu0
        %v753 = vpop.f32.mrb[0].mxu0
        %v754 = vadd.f32 0.0, %v753
        %v755 = vpop.f32.mrb[0].mxu0
        %756 = vmatprep.mubr.bf16.mxu0 %v547
        %757 = vmatmul.mubr.bf16.gmra.mrb[0].mxu0 %v546
        %v758 = vpop.f32.mrb[0].mxu0
        %v759 = vadd.f32 0.0, %v758
        %v760 = vpop.f32.mrb[0].mxu0
        %v761 = vpop.f32.mrb[0].mxu0
        %v762 = vadd.f32 0.0, %v761
        %v763 = vpop.f32.mrb[0].mxu0
        %764 = vmatprep.mubr.bf16.mxu0 %v549
        %765 = vmatmul.mubr.bf16.gmra.mrb[0].mxu0 %v548
        %v766 = vpop.f32.mrb[0].mxu0
        %v767 = vadd.f32 0.0, %v766
        %v768 = vpop.f32.mrb[0].mxu0
        %v769 = vpop.f32.mrb[0].mxu0
        %v770 = vadd.f32 0.0, %v769
        %v771 = vpop.f32.mrb[0].mxu0
        %772 = vmatprep.mubr.bf16.mxu0 %v551
        %773 = vmatmul.mubr.bf16.gmra.mrb[0].mxu0 %v550
        %v774 = vpop.f32.mrb[0].mxu0
        %v775 = vadd.f32 0.0, %v774
        %v776 = vpop.f32.mrb[0].mxu0
        %v777 = vpop.f32.mrb[0].mxu0
        %v778 = vadd.f32 0.0, %v777
        %v779 = vpop.f32.mrb[0].mxu0
        %780 = vmatprep.mubr.bf16.mxu0 %v553
        %781 = vmatmul.mubr.bf16.gmra.mrb[0].mxu0 %v552
        %v782 = vpop.f32.mrb[0].mxu0
        %v783 = vadd.f32 0.0, %v782
        %v784 = vpop.f32.mrb[0].mxu0
        %v785 = vpop.f32.mrb[0].mxu0
        %v786 = vadd.f32 0.0, %v785
        %v787 = vpop.f32.mrb[0].mxu0
        %788 = vmatprep.mubr.bf16.mxu0 %v555
        %789 = vmatmul.mubr.bf16.gmra.mrb[0].mxu0 %v554
        %v790 = vpop.f32.mrb[0].mxu0
        %v791 = vadd.f32 0.0, %v790
        %v792 = vpop.f32.mrb[0].mxu0
        %v793 = vpop.f32.mrb[0].mxu0
        %v794 = vadd.f32 0.0, %v793
        %v795 = vpop.f32.mrb[0].mxu0
        %796 = vmatprep.mubr.bf16.mxu0 %v557
        %797 = vmatmul.mubr.bf16.gmra.mrb[0].mxu0 %v556
        %v798 = vpop.f32.mrb[0].mxu0
        %v799 = vadd.f32 0.0, %v798
        %v800 = vpop.f32.mrb[0].mxu0
        %v801 = vpop.f32.mrb[0].mxu0
        %v802 = vadd.f32 0.0, %v801
        %v803 = vpop.f32.mrb[0].mxu0
        %804 = vmatprep.mubr.bf16.mxu0 %v559
        %805 = vmatmul.mubr.bf16.gmra.mrb[0].mxu0 %v558
        %v806 = vpop.f32.mrb[0].mxu0
        %v807 = vadd.f32 0.0, %v806
        %v808 = vpop.f32.mrb[0].mxu0
        %v809 = vpop.f32.mrb[0].mxu0
        %v810 = vadd.f32 0.0, %v809
        %v811 = vpop.f32.mrb[0].mxu0
        %812 = vmatprep.mubr.bf16.mxu0 %v561
        %813 = vmatmul.mubr.bf16.gmra.mrb[0].mxu0 %v560
        %v814 = vpop.f32.mrb[0].mxu0
        %v815 = vadd.f32 0.0, %v814
        %v816 = vpop.f32.mrb[0].mxu0
        %v817 = vpop.f32.mrb[0].mxu0
        %v818 = vadd.f32 0.0, %v817
        %v819 = vpop.f32.mrb[0].mxu0
        %820 = vmatprep.mubr.bf16.mxu0 %v563
        %821 = vmatmul.mubr.bf16.gmra.mrb[0].mxu0 %v562
        %v822 = vpop.f32.mrb[0].mxu0
        %v823 = vadd.f32 0.0, %v822
        %v824 = vpop.f32.mrb[0].mxu0
        %v825 = vpop.f32.mrb[0].mxu0
        %v826 = vadd.f32 0.0, %v825
        %v827 = vpop.f32.mrb[0].mxu0
        %828 = vmatprep.mubr.bf16.mxu0 %v565
        %829 = vmatmul.mubr.bf16.gmra.mrb[0].mxu0 %v564
        %v830 = vpop.f32.mrb[0].mxu0
        %v831 = vadd.f32 0.0, %v830
        %v832 = vpop.f32.mrb[0].mxu0
        %v833 = vpop.f32.mrb[0].mxu0
        %v834 = vadd.f32 0.0, %v833
        %v835 = vpop.f32.mrb[0].mxu0
        %836 = vmatprep.mubr.bf16.mxu0 %v567
        %837 = vmatmul.mubr.bf16.gmra.mrb[0].mxu0 %v566
        %v838 = vpop.f32.mrb[0].mxu0
        %v839 = vadd.f32 0.0, %v838
        %v840 = vpop.f32.mrb[0].mxu0
        %v841 = vpop.f32.mrb[0].mxu0
        %v842 = vadd.f32 0.0, %v841
        %v843 = vpop.f32.mrb[0].mxu0
        %844 = vmatprep.mubr.bf16.mxu0 %v569
        %845 = vmatmul.mubr.bf16.gmra.mrb[0].mxu0 %v568
        %v846 = vpop.f32.mrb[0].mxu0
        %v847 = vadd.f32 0.0, %v846
        %v848 = vpop.f32.mrb[0].mxu0
        %v849 = vpop.f32.mrb[0].mxu0
        %v850 = vadd.f32 0.0, %v849
        %v851 = vpop.f32.mrb[0].mxu0
        %852 = vmatprep.mubr.bf16.mxu0 %v571
        %853 = vmatmul.mubr.bf16.gmra.mrb[0].mxu0 %v570
        %v854 = vpop.f32.mrb[0].mxu0
        %v855 = vadd.f32 0.0, %v854
        %v856 = vpop.f32.mrb[0].mxu0
        %v857 = vpop.f32.mrb[0].mxu0
        %v858 = vadd.f32 0.0, %v857
        %v859 = vpop.f32.mrb[0].mxu0
        %860 = vdwg.mxu0
        %v861 = vadd.f32 %v380, %v735
        %v862 = vadd.f32 %v381, %v738
        %v863 = vadd.f32 %v382, %v743
        %v864 = vadd.f32 %v383, %v746
        %v865 = vadd.f32 %v384, %v751
        %v866 = vadd.f32 %v385, %v754
        %v867 = vadd.f32 %v386, %v759
        %v868 = vadd.f32 %v387, %v762
        %v869 = vadd.f32 %v388, %v767
        %v870 = vadd.f32 %v389, %v770
        %v871 = vadd.f32 %v390, %v775
        %v872 = vadd.f32 %v391, %v778
        %v873 = vadd.f32 %v392, %v783
        %v874 = vadd.f32 %v393, %v786
        %v875 = vadd.f32 %v394, %v791
        %v876 = vadd.f32 %v395, %v794
        %v877 = vadd.f32 %v396, %v799
        %v878 = vadd.f32 %v397, %v802
        %v879 = vadd.f32 %v398, %v807
        %v880 = vadd.f32 %v399, %v810
        %v881 = vadd.f32 %v400, %v815
        %v882 = vadd.f32 %v401, %v818
        %v883 = vadd.f32 %v402, %v823
        %v884 = vadd.f32 %v403, %v826
        %v885 = vadd.f32 %v404, %v831
        %v886 = vadd.f32 %v405, %v834
        %v887 = vadd.f32 %v406, %v839
        %v888 = vadd.f32 %v407, %v842
        %v889 = vadd.f32 %v408, %v847
        %v890 = vadd.f32 %v409, %v850
        %v891 = vadd.f32 %v410, %v855
        %v892 = vadd.f32 %v411, %v858
        %893 = vst [vmem:[#allocation2] sm:$0xff] %v861
        %894 = vst [vmem:[#allocation2 + $0x8] sm:$0xff] %v862
        %895 = vst [vmem:[#allocation2 + $0x10] sm:$0xff] %v863
        %896 = vst [vmem:[#allocation2 + $0x18] sm:$0xff] %v864
        %897 = vst [vmem:[#allocation2 + $0x20] sm:$0xff] %v865
        %898 = vst [vmem:[#allocation2 + $0x28] sm:$0xff] %v866
        %899 = vst [vmem:[#allocation2 + $0x30] sm:$0xff] %v867
        %900 = vst [vmem:[#allocation2 + $0x38] sm:$0xff] %v868
        %901 = vst [vmem:[#allocation2 + $0x40] sm:$0xff] %v869
        %902 = vst [vmem:[#allocation2 + $0x48] sm:$0xff] %v870
        %903 = vst [vmem:[#allocation2 + $0x50] sm:$0xff] %v871
        %904 = vst [vmem:[#allocation2 + $0x58] sm:$0xff] %v872
        %905 = vst [vmem:[#allocation2 + $0x60] sm:$0xff] %v873
        %906 = vst [vmem:[#allocation2 + $0x68] sm:$0xff] %v874
        %907 = vst [vmem:[#allocation2 + $0x70] sm:$0xff] %v875
        %908 = vst [vmem:[#allocation2 + $0x78] sm:$0xff] %v876
        %909 = vst [vmem:[#allocation2 + $0x80] sm:$0xff] %v877
        %910 = vst [vmem:[#allocation2 + $0x88] sm:$0xff] %v878
        %911 = vst [vmem:[#allocation2 + $0x90] sm:$0xff] %v879
        %912 = vst [vmem:[#allocation2 + $0x98] sm:$0xff] %v880
        %913 = vst [vmem:[#allocation2 + $0xa0] sm:$0xff] %v881
        %914 = vst [vmem:[#allocation2 + $0xa8] sm:$0xff] %v882
        %915 = vst [vmem:[#allocation2 + $0xb0] sm:$0xff] %v883
        %916 = vst [vmem:[#allocation2 + $0xb8] sm:$0xff] %v884
        %917 = vst [vmem:[#allocation2 + $0xc0] sm:$0xff] %v885
        %918 = vst [vmem:[#allocation2 + $0xc8] sm:$0xff] %v886
        %919 = vst [vmem:[#allocation2 + $0xd0] sm:$0xff] %v887
        %920 = vst [vmem:[#allocation2 + $0xd8] sm:$0xff] %v888
        %921 = vst [vmem:[#allocation2 + $0xe0] sm:$0xff] %v889
        %922 = vst [vmem:[#allocation2 + $0xe8] sm:$0xff] %v890
        %923 = vst [vmem:[#allocation2 + $0xf0] sm:$0xff] %v891
        %924 = vst [vmem:[#allocation2 + $0xf8] sm:$0xff] %v892
        // Predicated region
        $region57: #{tpu_custom_call.1} parent=35 // pred_check
          %p925 = pneg %p312
        $region58: #{tpu_custom_call.1} parent=35 // pred_check_branch
          %927 = sbr.rel (%p925) target = $region60
        $region59: #{tpu_custom_call.1} parent=35 // pred_region
          %v928 = vld [vmem:[#allocation2] sm:$0xff]
          %v929 = vld [vmem:[#allocation2 + $0x8] sm:$0xff]
          %v930 = vld [vmem:[#allocation2 + $0x10] sm:$0xff]
          %v931 = vld [vmem:[#allocation2 + $0x18] sm:$0xff]
          %v932 = vld [vmem:[#allocation2 + $0x20] sm:$0xff]
          %v933 = vld [vmem:[#allocation2 + $0x28] sm:$0xff]
          %v934 = vld [vmem:[#allocation2 + $0x30] sm:$0xff]
          %v935 = vld [vmem:[#allocation2 + $0x38] sm:$0xff]
          %v936 = vld [vmem:[#allocation2 + $0x40] sm:$0xff]
          %v937 = vld [vmem:[#allocation2 + $0x48] sm:$0xff]
          %v938 = vld [vmem:[#allocation2 + $0x50] sm:$0xff]
          %v939 = vld [vmem:[#allocation2 + $0x58] sm:$0xff]
          %v940 = vld [vmem:[#allocation2 + $0x60] sm:$0xff]
          %v941 = vld [vmem:[#allocation2 + $0x68] sm:$0xff]
          %v942 = vld [vmem:[#allocation2 + $0x70] sm:$0xff]
          %v943 = vld [vmem:[#allocation2 + $0x78] sm:$0xff]
          %v944 = vld [vmem:[#allocation2 + $0x80] sm:$0xff]
          %v945 = vld [vmem:[#allocation2 + $0x88] sm:$0xff]
          %v946 = vld [vmem:[#allocation2 + $0x90] sm:$0xff]
          %v947 = vld [vmem:[#allocation2 + $0x98] sm:$0xff]
          %v948 = vld [vmem:[#allocation2 + $0xa0] sm:$0xff]
          %v949 = vld [vmem:[#allocation2 + $0xa8] sm:$0xff]
          %v950 = vld [vmem:[#allocation2 + $0xb0] sm:$0xff]
          %v951 = vld [vmem:[#allocation2 + $0xb8] sm:$0xff]
          %v952 = vld [vmem:[#allocation2 + $0xc0] sm:$0xff]
          %v953 = vld [vmem:[#allocation2 + $0xc8] sm:$0xff]
          %v954 = vld [vmem:[#allocation2 + $0xd0] sm:$0xff]
          %v955 = vld [vmem:[#allocation2 + $0xd8] sm:$0xff]
          %v956 = vld [vmem:[#allocation2 + $0xe0] sm:$0xff]
          %v957 = vld [vmem:[#allocation2 + $0xe8] sm:$0xff]
          %v958 = vld [vmem:[#allocation2 + $0xf0] sm:$0xff]
          %v959 = vld [vmem:[#allocation2 + $0xf8] sm:$0xff]
          %v960 = vld [vmem:[#allocation8] sm:$0x1]
          %v962 = vlaneseq
          %v963 = vshrl.u32 %v962, 7
          %v964 = vsub.s32 0, %v963
          %v965 = vrot.slane %v960, %v964
          %v967 = vmul.f32 %v928, %v965
          %v968 = vmul.f32 %v929, %v965
          %v969 = vmul.f32 %v930, %v965
          %v970 = vmul.f32 %v931, %v965
          %v971 = vmul.f32 %v932, %v965
          %v972 = vmul.f32 %v933, %v965
          %v973 = vmul.f32 %v934, %v965
          %v974 = vmul.f32 %v935, %v965
          %v975 = vmul.f32 %v936, %v965
          %v976 = vmul.f32 %v937, %v965
          %v977 = vmul.f32 %v938, %v965
          %v978 = vmul.f32 %v939, %v965
          %v979 = vmul.f32 %v940, %v965
          %v980 = vmul.f32 %v941, %v965
          %v981 = vmul.f32 %v942, %v965
          %v982 = vmul.f32 %v943, %v965
          %v983 = vmul.f32 %v944, %v965
          %v984 = vmul.f32 %v945, %v965
          %v985 = vmul.f32 %v946, %v965
          %v986 = vmul.f32 %v947, %v965
          %v987 = vmul.f32 %v948, %v965
          %v988 = vmul.f32 %v949, %v965
          %v989 = vmul.f32 %v950, %v965
          %v990 = vmul.f32 %v951, %v965
          %v991 = vmul.f32 %v952, %v965
          %v992 = vmul.f32 %v953, %v965
          %v993 = vmul.f32 %v954, %v965
          %v994 = vmul.f32 %v955, %v965
          %v995 = vmul.f32 %v956, %v965
          %v996 = vmul.f32 %v957, %v965
          %v997 = vmul.f32 %v958, %v965
          %v998 = vmul.f32 %v959, %v965
          %v999 = vld [vmem:[#allocation9] sm:$0x1]
          %v1001 = vlaneseq
          %v1002 = vshrl.u32 %v1001, 7
          %v1003 = vsub.s32 0, %v1002
          %v1004 = vrot.slane %v999, %v1003
          %v1006 = vadd.f32 %v967, %v1004
          %v1007 = vadd.f32 %v968, %v1004
          %v1008 = vadd.f32 %v969, %v1004
          %v1009 = vadd.f32 %v970, %v1004
          %v1010 = vadd.f32 %v971, %v1004
          %v1011 = vadd.f32 %v972, %v1004
          %v1012 = vadd.f32 %v973, %v1004
          %v1013 = vadd.f32 %v974, %v1004
          %v1014 = vadd.f32 %v975, %v1004
          %v1015 = vadd.f32 %v976, %v1004
          %v1016 = vadd.f32 %v977, %v1004
          %v1017 = vadd.f32 %v978, %v1004
          %v1018 = vadd.f32 %v979, %v1004
          %v1019 = vadd.f32 %v980, %v1004
          %v1020 = vadd.f32 %v981, %v1004
          %v1021 = vadd.f32 %v982, %v1004
          %v1022 = vadd.f32 %v983, %v1004
          %v1023 = vadd.f32 %v984, %v1004
          %v1024 = vadd.f32 %v985, %v1004
          %v1025 = vadd.f32 %v986, %v1004
          %v1026 = vadd.f32 %v987, %v1004
          %v1027 = vadd.f32 %v988, %v1004
          %v1028 = vadd.f32 %v989, %v1004
          %v1029 = vadd.f32 %v990, %v1004
          %v1030 = vadd.f32 %v991, %v1004
          %v1031 = vadd.f32 %v992, %v1004
          %v1032 = vadd.f32 %v993, %v1004
          %v1033 = vadd.f32 %v994, %v1004
          %v1034 = vadd.f32 %v995, %v1004
          %v1035 = vadd.f32 %v996, %v1004
          %v1036 = vadd.f32 %v997, %v1004
          %v1037 = vadd.f32 %v998, %v1004
          %v1038 = vmax.f32 %v1006, 0.0
          %v1039 = vmax.f32 %v1007, 0.0
          %v1040 = vmax.f32 %v1008, 0.0
          %v1041 = vmax.f32 %v1009, 0.0
          %v1042 = vmax.f32 %v1010, 0.0
          %v1043 = vmax.f32 %v1011, 0.0
          %v1044 = vmax.f32 %v1012, 0.0
          %v1045 = vmax.f32 %v1013, 0.0
          %v1046 = vmax.f32 %v1014, 0.0
          %v1047 = vmax.f32 %v1015, 0.0
          %v1048 = vmax.f32 %v1016, 0.0
          %v1049 = vmax.f32 %v1017, 0.0
          %v1050 = vmax.f32 %v1018, 0.0
          %v1051 = vmax.f32 %v1019, 0.0
          %v1052 = vmax.f32 %v1020, 0.0
          %v1053 = vmax.f32 %v1021, 0.0
          %v1054 = vmax.f32 %v1022, 0.0
          %v1055 = vmax.f32 %v1023, 0.0
          %v1056 = vmax.f32 %v1024, 0.0
          %v1057 = vmax.f32 %v1025, 0.0
          %v1058 = vmax.f32 %v1026, 0.0
          %v1059 = vmax.f32 %v1027, 0.0
          %v1060 = vmax.f32 %v1028, 0.0
          %v1061 = vmax.f32 %v1029, 0.0
          %v1062 = vmax.f32 %v1030, 0.0
          %v1063 = vmax.f32 %v1031, 0.0
          %v1064 = vmax.f32 %v1032, 0.0
          %v1065 = vmax.f32 %v1033, 0.0
          %v1066 = vmax.f32 %v1034, 0.0
          %v1067 = vmax.f32 %v1035, 0.0
          %v1068 = vmax.f32 %v1036, 0.0
          %v1069 = vmax.f32 %v1037, 0.0
          %v1070 = vpack.c.bf16 %v1039, %v1038
          %v1071 = vpack.c.bf16 %v1041, %v1040
          %v1072 = vpack.c.bf16 %v1043, %v1042
          %v1073 = vpack.c.bf16 %v1045, %v1044
          %v1074 = vpack.c.bf16 %v1047, %v1046
          %v1075 = vpack.c.bf16 %v1049, %v1048
          %v1076 = vpack.c.bf16 %v1051, %v1050
          %v1077 = vpack.c.bf16 %v1053, %v1052
          %v1078 = vpack.c.bf16 %v1055, %v1054
          %v1079 = vpack.c.bf16 %v1057, %v1056
          %v1080 = vpack.c.bf16 %v1059, %v1058
          %v1081 = vpack.c.bf16 %v1061, %v1060
          %v1082 = vpack.c.bf16 %v1063, %v1062
          %v1083 = vpack.c.bf16 %v1065, %v1064
          %v1084 = vpack.c.bf16 %v1067, %v1066
          %v1085 = vpack.c.bf16 %v1069, %v1068
          %v1102 = vunpack.c.l.b16 %v1070
          %v1103 = vunpack.c.h.b16 %v1070
          %v1104 = vunpack.c.l.b16 %v1071
          %v1105 = vunpack.c.h.b16 %v1071
          %v1106 = vunpack.c.l.b16 %v1072
          %v1107 = vunpack.c.h.b16 %v1072
          %v1108 = vunpack.c.l.b16 %v1073
          %v1109 = vunpack.c.h.b16 %v1073
          %v1110 = vunpack.c.l.b16 %v1074
          %v1111 = vunpack.c.h.b16 %v1074
          %v1112 = vunpack.c.l.b16 %v1075
          %v1113 = vunpack.c.h.b16 %v1075
          %v1114 = vunpack.c.l.b16 %v1076
          %v1115 = vunpack.c.h.b16 %v1076
          %v1116 = vunpack.c.l.b16 %v1077
          %v1117 = vunpack.c.h.b16 %v1077
          %v1118 = vunpack.c.l.b16 %v1078
          %v1119 = vunpack.c.h.b16 %v1078
          %v1120 = vunpack.c.l.b16 %v1079
          %v1121 = vunpack.c.h.b16 %v1079
          %v1122 = vunpack.c.l.b16 %v1080
          %v1123 = vunpack.c.h.b16 %v1080
          %v1124 = vunpack.c.l.b16 %v1081
          %v1125 = vunpack.c.h.b16 %v1081
          %v1126 = vunpack.c.l.b16 %v1082
          %v1127 = vunpack.c.h.b16 %v1082
          %v1128 = vunpack.c.l.b16 %v1083
          %v1129 = vunpack.c.h.b16 %v1083
          %v1130 = vunpack.c.l.b16 %v1084
          %v1131 = vunpack.c.h.b16 %v1084
          %v1132 = vunpack.c.l.b16 %v1085
          %v1133 = vunpack.c.h.b16 %v1085
          %v1134 = vpack.c.b16 %v1102, %v1102
          %v1135 = vpack.c.b16 %v1103, %v1103
          %v1136 = vpack.c.b16 %v1104, %v1104
          %v1137 = vpack.c.b16 %v1105, %v1105
          %v1138 = vpack.c.b16 %v1106, %v1106
          %v1139 = vpack.c.b16 %v1107, %v1107
          %v1140 = vpack.c.b16 %v1108, %v1108
          %v1141 = vpack.c.b16 %v1109, %v1109
          %v1142 = vpack.c.b16 %v1110, %v1110
          %v1143 = vpack.c.b16 %v1111, %v1111
          %v1144 = vpack.c.b16 %v1112, %v1112
          %v1145 = vpack.c.b16 %v1113, %v1113
          %v1146 = vpack.c.b16 %v1114, %v1114
          %v1147 = vpack.c.b16 %v1115, %v1115
          %v1148 = vpack.c.b16 %v1116, %v1116
          %v1149 = vpack.c.b16 %v1117, %v1117
          %v1150 = vpack.c.b16 %v1118, %v1118
          %v1151 = vpack.c.b16 %v1119, %v1119
          %v1152 = vpack.c.b16 %v1120, %v1120
          %v1153 = vpack.c.b16 %v1121, %v1121
          %v1154 = vpack.c.b16 %v1122, %v1122
          %v1155 = vpack.c.b16 %v1123, %v1123
          %v1156 = vpack.c.b16 %v1124, %v1124
          %v1157 = vpack.c.b16 %v1125, %v1125
          %v1158 = vpack.c.b16 %v1126, %v1126
          %v1159 = vpack.c.b16 %v1127, %v1127
          %v1160 = vpack.c.b16 %v1128, %v1128
          %v1161 = vpack.c.b16 %v1129, %v1129
          %v1162 = vpack.c.b16 %v1130, %v1130
          %v1163 = vpack.c.b16 %v1131, %v1131
          %v1164 = vpack.c.b16 %v1132, %v1132
          %v1165 = vpack.c.b16 %v1133, %v1133
          %1198 = vst [vmem:[%s306] sm:$0xf] %v1134
          %1199 = vst [vmem:[%s306 + $0x4] sm:$0xf] %v1135
          %1200 = vst [vmem:[%s306 + $0x8] sm:$0xf] %v1136
          %1201 = vst [vmem:[%s306 + $0xc] sm:$0xf] %v1137
          %1202 = vst [vmem:[%s306 + $0x10] sm:$0xf] %v1138
          %1203 = vst [vmem:[%s306 + $0x14] sm:$0xf] %v1139
          %1204 = vst [vmem:[%s306 + $0x18] sm:$0xf] %v1140
          %1205 = vst [vmem:[%s306 + $0x1c] sm:$0xf] %v1141
          %1206 = vst [vmem:[%s306 + $0x20] sm:$0xf] %v1142
          %1207 = vst [vmem:[%s306 + $0x24] sm:$0xf] %v1143
          %1208 = vst [vmem:[%s306 + $0x28] sm:$0xf] %v1144
          %1209 = vst [vmem:[%s306 + $0x2c] sm:$0xf] %v1145
          %1210 = vst [vmem:[%s306 + $0x30] sm:$0xf] %v1146
          %1211 = vst [vmem:[%s306 + $0x34] sm:$0xf] %v1147
          %1212 = vst [vmem:[%s306 + $0x38] sm:$0xf] %v1148
          %1213 = vst [vmem:[%s306 + $0x3c] sm:$0xf] %v1149
          %1214 = vst [vmem:[%s306 + $0x40] sm:$0xf] %v1150
          %1215 = vst [vmem:[%s306 + $0x44] sm:$0xf] %v1151
          %1216 = vst [vmem:[%s306 + $0x48] sm:$0xf] %v1152
          %1217 = vst [vmem:[%s306 + $0x4c] sm:$0xf] %v1153
          %1218 = vst [vmem:[%s306 + $0x50] sm:$0xf] %v1154
          %1219 = vst [vmem:[%s306 + $0x54] sm:$0xf] %v1155
          %1220 = vst [vmem:[%s306 + $0x58] sm:$0xf] %v1156
          %1221 = vst [vmem:[%s306 + $0x5c] sm:$0xf] %v1157
          %1222 = vst [vmem:[%s306 + $0x60] sm:$0xf] %v1158
          %1223 = vst [vmem:[%s306 + $0x64] sm:$0xf] %v1159
          %1224 = vst [vmem:[%s306 + $0x68] sm:$0xf] %v1160
          %1225 = vst [vmem:[%s306 + $0x6c] sm:$0xf] %v1161
          %1226 = vst [vmem:[%s306 + $0x70] sm:$0xf] %v1162
          %1227 = vst [vmem:[%s306 + $0x74] sm:$0xf] %v1163
          %1228 = vst [vmem:[%s306 + $0x78] sm:$0xf] %v1164
          %1229 = vst [vmem:[%s306 + $0x7c] sm:$0xf] %v1165
        $region60: #{tpu_custom_call.1} parent=35 // pred_fallthru
          _
        %s1230 = sand.u32 %s160, 1
        %s1231 = scalar_lea.sflag [#allocation5], %s1230
        %s1232 = sand.u32 %s160, 1
        %s1233 = smul.addr %s1232, 128
        %s1234 = scalar_lea.vmem [#allocation11], %s1233
        // Predicated region
        $region61: #{tpu_custom_call.1} parent=35 // pred_check
          %p1235 = pneg %p170
        $region62: #{tpu_custom_call.1} parent=35 // pred_check_branch
          %1237 = sbr.rel (%p1235) target = $region64
        $region63: #{tpu_custom_call.1} parent=35 // pred_region
          %s1238 = smul.u32 32, %s28
          %s1240 = ssub.s32 2048, 2048
          %1241 = vsyncadd %s1231, %s1240
          %s1242 = sadd.s32 %s29, %s1238
          %s1243 = smul.addr %s1242, 64
          %s1244 = scalar_lea.hbm %s4, %s1243
          %s1245 = sshll.u32 %s1234, 4
          %s1246 = int_to_ptr.vmem [resolvable:$true] %s1245
          %1251 = dma.vmem_to_hbm [thread:$0]  %s1246, 2048, %s1244, %s1231, 64, 64, 4
        $region64: #{tpu_custom_call.1} parent=35 // pred_fallthru
          _
      $region36: #{tpu_custom_call.1} parent=5 // pred_fallthru
        _
      %p1252 = scmp.le.s32.totalorder 2, %s18
      // Predicated region
      $region65: #{tpu_custom_call.1} parent=5 // pred_check
        %p1253 = pneg %p1252
      $region66: #{tpu_custom_call.1} parent=5 // pred_check_branch
        %1255 = sbr.rel (%p1253) target = $region68
      $region67: #{tpu_custom_call.1} parent=5 // pred_region
        %s1256 = ssub.s32 %s18, 2
        // Predicated region
        $region69: #{tpu_custom_call.1} parent=67 // pred_check
          %p1257 = pneg %p176
        $region70: #{tpu_custom_call.1} parent=67 // pred_check_branch
          %1259 = sbr.rel (%p1257) target = $region72
        $region71: #{tpu_custom_call.1} parent=67 // pred_region
          %s1260 = sand.u32 %s161, 1
          %s1261 = scalar_lea.sflag [#allocation5], %s1260
          %s1262 = sand.u32 %s161, 1
          %s1263 = smul.addr %s1262, 128
          %s1264 = scalar_lea.vmem [#allocation11], %s1263
          %1265 = dma.done %s1261, 2048
        $region72: #{tpu_custom_call.1} parent=67 // pred_fallthru
          _
      $region68: #{tpu_custom_call.1} parent=5 // pred_fallthru
        _
    $region6: #{tpu_custom_call.1} parent=1 // loop_footer
      %s22 = sadd.s32 1, %s18
    $region7: #{tpu_custom_call.1} parent=1 // loop_footer_branch
      %17 = sbr.rel target = $region3
    $region8: #{tpu_custom_call.1} parent=1 // loop_exit
      _
    %1266 = vsyncpa [#allocation4], 1
    %s1267 = scalar_lea.sflag [#allocation4], 1
    %1268 = vsyncpa %s1267, 1
    %1269 = vsyncpa [#allocation7], 1
    %1270 = vsyncpa [#allocation10], 1
    %1271 = vsyncpa [#allocation5], 1
    %s1272 = scalar_lea.sflag [#allocation5], 1
    %1273 = vsyncpa %s1272, 1

</llo_original>
